<compile_context>
chip_gen: v6e
topology: v6e:2x2x1
jax: 0.10.0
libtpu: 0.0.40
codegen_flags: <defaults>
</compile_context>

<pallas_src>
import functools
from math import sqrt

import jax
import jax.numpy as jnp
from jax.experimental import pallas as pl
from jax.experimental.pallas import tpu as pltpu


def _round_up(x, m):
    return (x + m - 1) // m * m


def _bnn_conv_kernel(w_mu_ref, w_std_ref, b_mu_ref, b_std_ref,
                     w_eps_ref, b_eps_ref, x_ref, out_ref,
                     w_s, b_s, acc,
                     *, offsets, tile_p, halo, n_p_tiles, compute_dtype):
    """One grid step == (one batch element, one flat-output tile).

    x_ref holds the whole zero-padded, flattened input image of this batch
    element; im2col patch rows are formed in-VMEM as lane-shifted slices of it
    (no materialized im2col in HBM).
    """
    p = pl.program_id(1)

    # Sample the per-batch weight/bias once (first P tile of this batch) and
    # carry it across the remaining P tiles in VMEM scratch.
    @pl.when(p == 0)
    def _():
        w_s[...] = (w_mu_ref[...]
                    + w_eps_ref[0].astype(jnp.float32) * w_std_ref[...]
                    ).astype(compute_dtype)
        b_s[...] = b_mu_ref[...] + b_eps_ref[0] * b_std_ref[...]

    # Aligned window of the flat input covering this output tile plus halo.
    if n_p_tiles == 1:
        start = 0                                   # fully static slice
    else:
        start = pl.multiple_of(p * tile_p, 128)     # lane-aligned dynamic start
    xwin = x_ref[0, :, pl.ds(start, tile_p + halo)]  # (C, tile_p + halo), bf16

    acc[...] = jnp.zeros_like(acc)
    for idx, off in enumerate(offsets):             # static unroll: kh*kw taps
        xs = xwin[:, off:off + tile_p]              # (C, tile_p), static lane shift
        acc[...] += jnp.dot(w_s[idx], xs,           # MXU, f32 accumulation
                            preferred_element_type=jnp.float32)
    out_ref[0] = (acc[...] + b_s[...]).astype(out_ref.dtype)


def _vmem_limit_bytes():
    """Generation-aware VMEM limit (v5e/v6e: 128 MiB, v7x: 64 MiB/TC)."""
    try:
        cap = int(pltpu.get_tpu_info().vmem_capacity_bytes)
    except Exception:
        cap = 64 << 20                      # conservative fallback (v7x per-core)
    return max(32 << 20, min(cap * 3 // 4, cap - (16 << 20)))


def gaussian_conv2d(x, w_mu, w_sigma, b_mu, b_sigma, w_eps, b_eps, *,
                    var_type="sq", stride=1, padding=0, dilation=1,
                    compute_dtype=jnp.bfloat16):
    """Forward pass of Gaussian_Conv2D (groups=1, bias=True)."""
    B, C, H, W = x.shape
    out_c, in_c, kh, kw = w_mu.shape
    assert in_c == C

    H_p, W_p = H + 2 * padding, W + 2 * padding
    out_h = (H_p - dilation * (kh - 1) - 1) // stride + 1
    out_w = (W_p - dilation * (kw - 1) - 1) // stride + 1
    oh_d = H_p - dilation * (kh - 1)          # dense (stride-1) output rows
    K = C * kh * kw
    P_dense = oh_d * W_p                      # dense flat output positions
    off_max = (kh - 1) * dilation * W_p + (kw - 1) * dilation
    halo = _round_up(off_max, 128)

    cb = jnp.dtype(compute_dtype).itemsize
    ob = jnp.dtype(x.dtype).itemsize

    # ---- generation-aware VMEM budget & tile size (count ALL residents) -----
    vmem_limit = _vmem_limit_bytes()
    budget = vmem_limit - (8 << 20)           # headroom for Mosaic internals
    p_up = _round_up(max(P_dense, 128), 128)
    L_est = p_up + halo + 128
    fixed = (2 * C * L_est * cb               # x image block (double-buffered)
             + 2 * K * out_c * cb             # per-sample eps block (double-buffered)
             + 4 * K * out_c * 4              # w_mu + w_std blocks (f32, worst case x2 bufs)
             + K * out_c * cb                 # sampled-weight scratch
             + C * halo * cb                  # window halo
             + (2 << 20))                     # small refs + slack
    per_lane = 2 * out_c * ob + out_c * 4 + 3 * C * cb   # out x2 + f32 acc + window/slices
    tile_max = max(128, min(p_up, (max(budget - fixed, 0) // per_lane) // 128 * 128))
    n_p_tiles = -(-p_up // tile_max)
    tile_p = _round_up(-(-p_up // n_p_tiles), 128)       # balance tiles: no mostly-pad tail
    P_pad = n_p_tiles * tile_p
    L_pad = P_pad + halo

    # ---- wrapper-side prep: pad + flatten x, relayout params (no im2col) ----
    xp = jnp.pad(x, ((0, 0), (0, 0), (padding, padding), (padding, padding)))
    x_flat = xp.reshape(B, C, H_p * W_p).astype(compute_dtype)
    x_flat = jnp.pad(x_flat, ((0, 0), (0, 0), (0, L_pad - H_p * W_p)))

    # Batch-invariant |std| work hoisted out of the kernel.
    if var_type == "exp":
        w_std_abs = jnp.exp(w_sigma / 2.0)    # > 0, abs() is a no-op
        b_std_abs = jnp.exp(b_sigma / 2.0)
    else:  # "sq"
        w_std_abs = jnp.abs(w_sigma)
        b_std_abs = jnp.abs(b_sigma)

    # (out_c, C, kh, kw) -> (kh*kw, out_c, C): the tap index leads so the kernel
    # slices the sampled weight with a cheap static leading index per tap.
    def tap_layout(t):
        return t.transpose(2, 3, 0, 1).reshape(kh * kw, out_c, C)

    w_mu3 = tap_layout(w_mu).astype(jnp.float32)
    w_std3 = tap_layout(w_std_abs).astype(jnp.float32)
    w_eps3 = (w_eps.transpose(0, 3, 4, 1, 2)
              .reshape(B, kh * kw, out_c, C).astype(compute_dtype))
    b_mu2 = b_mu.reshape(out_c, 1).astype(jnp.float32)
    b_std2 = b_std_abs.reshape(out_c, 1).astype(jnp.float32)
    b_eps2 = b_eps.reshape(B, out_c, 1).astype(jnp.float32)

    # Flat-lane offsets of the kh*kw conv taps (order matches tap_layout).
    offsets = tuple(i * dilation * W_p + j * dilation
                    for i in range(kh) for j in range(kw))

    kernel = functools.partial(
        _bnn_conv_kernel, offsets=offsets, tile_p=tile_p, halo=halo,
        n_p_tiles=n_p_tiles, compute_dtype=compute_dtype)

    cost = pl.CostEstimate(
        flops=2 * B * out_c * K * P_pad,
        transcendentals=0,
        bytes_accessed=int(x_flat.size * cb + w_eps3.size * cb
                           + 2 * K * out_c * 4 + B * out_c * P_pad * ob))

    def build(single_buffer_invariants):
        def inv_spec(shape, imap):
            # Grid-invariant inputs don't need a second pipeline buffer.
            if single_buffer_invariants:
                return pl.BlockSpec(shape, imap, pipeline_mode=pl.Buffered(1))
            return pl.BlockSpec(shape, imap)

        return pl.pallas_call(
            kernel,
            out_shape=jax.ShapeDtypeStruct((B, out_c, P_pad), x.dtype),
            grid=(B, n_p_tiles),
            in_specs=[
                inv_spec((kh * kw, out_c, C), lambda b, p: (0, 0, 0)),        # w_mu
                inv_spec((kh * kw, out_c, C), lambda b, p: (0, 0, 0)),        # |w_std|
                inv_spec((out_c, 1), lambda b, p: (0, 0)),                    # b_mu
                inv_spec((out_c, 1), lambda b, p: (0, 0)),                    # |b_std|
                pl.BlockSpec((1, kh * kw, out_c, C), lambda b, p: (b, 0, 0, 0)),  # w eps (bf16)
                pl.BlockSpec((1, out_c, 1), lambda b, p: (b, 0, 0)),          # b eps
                pl.BlockSpec((1, C, L_pad), lambda b, p: (b, 0, 0)),          # flat padded x
            ],
            out_specs=pl.BlockSpec((1, out_c, tile_p), lambda b, p: (b, 0, p)),
            scratch_shapes=[
                pltpu.VMEM((kh * kw, out_c, C), compute_dtype),  # sampled weight (carried)
                pltpu.VMEM((out_c, 1), jnp.float32),             # sampled bias (carried)
                pltpu.VMEM((out_c, tile_p), jnp.float32),        # f32 accumulator
            ],
            compiler_params=pltpu.CompilerParams(
                # batch axis parallel (megacore); P axis arbitrary so the
                # sampled-weight scratch carry stays on one TensorCore.
                dimension_semantics=("parallel", "arbitrary"),
                vmem_limit_bytes=vmem_limit),
            cost_estimate=cost,
        )

    args = (w_mu3, w_std3, b_mu2, b_std2, w_eps3, b_eps2, x_flat)
    try:
        out = build(True)(*args)
    except Exception:
        # pipeline_mode=pl.Buffered(1) not supported on this jax version.
        out = build(False)(*args)

    # Dense flat output -> NCHW: drop pad, split rows, drop wrap-around columns,
    # apply stride subsampling.
    out = out[:, :, :P_dense].reshape(B, out_c, oh_d, W_p)
    out = out[:, :, ::stride, ::stride][:, :, :out_h, :out_w]
    return out


def _reference(x, w_mu, w_sigma, b_mu, b_sigma, w_eps, b_eps,
               var_type, stride, padding, dilation):
    """Pure-JAX reference mirroring the PyTorch forward loop (f32)."""
    if var_type == "exp":
        w_std = jnp.exp(w_sigma / 2.0)
        b_std = jnp.exp(b_sigma / 2.0)
    else:
        w_std = w_sigma
        b_std = b_sigma
    outs = []
    for i in range(x.shape[0]):
        w = w_mu + w_eps[i] * jnp.abs(w_std)
        b = b_mu + b_eps[i] * jnp.abs(b_std)
        y = jax.lax.conv_general_dilated(
            x[i:i + 1], w, (stride, stride),
            [(padding, padding), (padding, padding)],
            rhs_dilation=(dilation, dilation),
            dimension_numbers=("NCHW", "OIHW", "NCHW"))
        outs.append(y + b[None, :, None, None])
    return jnp.concatenate(outs, axis=0)


if __name__ == "__main__":
    # Module config: Gaussian_Conv2D(in_c=4, out_c=8, kernel_size=3, var_type="sq")
    B, C, H, W = 2, 4, 16, 16
    out_c, kh, kw = 8, 3, 3
    stride, padding, dilation, groups = 1, 0, 1, 1
    var_type = "sq"

    key = jax.random.PRNGKey(0)
    k_init = sqrt(groups / (C * kh * kw))  # He-style init std from the module
    ks = jax.random.split(key, 6)

    w_mu = k_init * jax.random.normal(ks[0], (out_c, C // groups, kh, kw), jnp.float32)
    w_sigma = k_init * jax.random.normal(ks[1], (out_c, C // groups, kh, kw), jnp.float32)
    b_mu = k_init * jax.random.normal(ks[2], (out_c,), jnp.float32)
    b_sigma = k_init * jax.random.normal(ks[3], (out_c,), jnp.float32)

    x = jax.random.normal(ks[4], (B, C, H, W), jnp.float32)

    # Per-batch-element reparameterization noise (the torch.normal(0,1,...) calls).
    ke1, ke2 = jax.random.split(ks[5])
    w_eps = jax.random.normal(ke1, (B, out_c, C // groups, kh, kw), jnp.float32)
    b_eps = jax.random.normal(ke2, (B, out_c), jnp.float32)

    y = gaussian_conv2d(x, w_mu, w_sigma, b_mu, b_sigma, w_eps, b_eps,
                        var_type=var_type, stride=stride,
                        padding=padding, dilation=dilation)
    y = jax.block_until_ready(y)

    y_ref = _reference(x, w_mu, w_sigma, b_mu, b_sigma, w_eps, b_eps,
                       var_type, stride, padding, dilation)
    assert y.shape == (B, out_c, 14, 14), y.shape
    # bf16 matmul operands (f32 accumulation) vs f32 reference -> relaxed tol.
    assert jnp.allclose(y, y_ref, atol=5e-2, rtol=5e-2), \
        float(jnp.max(jnp.abs(y - y_ref)))

    print("KERNEL_OK")
</pallas_src>

<mosaic_0001>
module attributes {stable_mosaic.version = 11 : i64} {
  func.func @_bnn_conv_kernel(%arg0: i32, %arg1: i32, %arg2: memref<9x8x4xf32, #tpu.memory_space<vmem>>, %arg3: memref<9x8x4xf32, #tpu.memory_space<vmem>>, %arg4: memref<8x1xf32, #tpu.memory_space<vmem>>, %arg5: memref<8x1xf32, #tpu.memory_space<vmem>>, %arg6: memref<1x9x8x4xbf16, #tpu.memory_space<vmem>>, %arg7: memref<1x8x1xf32, #tpu.memory_space<vmem>>, %arg8: memref<1x4x384xbf16, #tpu.memory_space<vmem>>, %arg9: memref<1x8x256xf32, #tpu.memory_space<vmem>>, %arg10: memref<9x8x4xbf16, #tpu.memory_space<vmem>>, %arg11: memref<8x1xf32, #tpu.memory_space<vmem>>, %arg12: memref<8x256xf32, #tpu.memory_space<vmem>>) attributes {dimension_semantics = [#tpu.dimension_semantics<parallel>, #tpu.dimension_semantics<arbitrary>], iteration_bounds = array<i64: 2, 1>, scalar_prefetch = 0 : i64, scratch_operands = 3 : i64, tpu.core_type = #tpu.core_type<tc>, window_params = [{pipeline_mode = #tpu.pipeline_mode<synchronous>, transform_indices = @transform_0, window_bounds = array<i64: 9, 8, 4>}, {pipeline_mode = #tpu.pipeline_mode<synchronous>, transform_indices = @transform_1, window_bounds = array<i64: 9, 8, 4>}, {pipeline_mode = #tpu.pipeline_mode<synchronous>, transform_indices = @transform_2, window_bounds = array<i64: 8, 1>}, {pipeline_mode = #tpu.pipeline_mode<synchronous>, transform_indices = @transform_3, window_bounds = array<i64: 8, 1>}, {transform_indices = @transform_4, window_bounds = array<i64: 1, 9, 8, 4>}, {transform_indices = @transform_5, window_bounds = array<i64: 1, 8, 1>}, {transform_indices = @transform_6, window_bounds = array<i64: 1, 4, 384>}, {transform_indices = @transform_7, window_bounds = array<i64: 1, 8, 256>}]} {
    %c0_i32 = arith.constant 0 : i32
    %0 = arith.cmpi eq, %arg1, %c0_i32 : i32
    %1 = arith.extui %0 : i1 to i32
    %c0_i32_0 = arith.constant 0 : i32
    %2 = arith.cmpi ne, %1, %c0_i32_0 : i32
    scf.if %2 {
      %c0_76 = arith.constant 0 : index
      %c0_77 = arith.constant 0 : index
      %c0_78 = arith.constant 0 : index
      %77 = vector.load %arg2[%c0_76, %c0_77, %c0_78] : memref<9x8x4xf32, #tpu.memory_space<vmem>>, vector<9x8x4xf32>
      %c0_79 = arith.constant 0 : index
      %c0_80 = arith.constant 0 : index
      %c0_81 = arith.constant 0 : index
      %c0_82 = arith.constant 0 : index
      %78 = vector.load %arg6[%c0_79, %c0_80, %c0_81, %c0_82] : memref<1x9x8x4xbf16, #tpu.memory_space<vmem>>, vector<1x9x8x4xbf16>
      %79 = vector.shape_cast %78 : vector<1x9x8x4xbf16> to vector<9x8x4xbf16>
      %80 = arith.extf %79 : vector<9x8x4xbf16> to vector<9x8x4xf32>
      %c0_83 = arith.constant 0 : index
      %c0_84 = arith.constant 0 : index
      %c0_85 = arith.constant 0 : index
      %81 = vector.load %arg3[%c0_83, %c0_84, %c0_85] : memref<9x8x4xf32, #tpu.memory_space<vmem>>, vector<9x8x4xf32>
      %82 = arith.mulf %80, %81 : vector<9x8x4xf32>
      %83 = arith.addf %77, %82 : vector<9x8x4xf32>
      %84 = arith.truncf %83 : vector<9x8x4xf32> to vector<9x8x4xbf16>
      %c0_86 = arith.constant 0 : index
      %c0_87 = arith.constant 0 : index
      %c0_88 = arith.constant 0 : index
      %85 = vector.load %arg10[%c0_86, %c0_87, %c0_88] : memref<9x8x4xbf16, #tpu.memory_space<vmem>>, vector<9x8x4xbf16>
      tpu.vector_store %arg10[%c0_86, %c0_87, %c0_88], %84 {strides = array<i32>} : memref<9x8x4xbf16, #tpu.memory_space<vmem>>, vector<9x8x4xbf16>,
      %c0_89 = arith.constant 0 : index
      %c0_90 = arith.constant 0 : index
      %86 = vector.load %arg4[%c0_89, %c0_90] : memref<8x1xf32, #tpu.memory_space<vmem>>, vector<8x1xf32>
      %c0_91 = arith.constant 0 : index
      %c0_92 = arith.constant 0 : index
      %c0_93 = arith.constant 0 : index
      %87 = vector.load %arg7[%c0_91, %c0_92, %c0_93] : memref<1x8x1xf32, #tpu.memory_space<vmem>>, vector<1x8x1xf32>
      %88 = vector.shape_cast %87 : vector<1x8x1xf32> to vector<8x1xf32>
      %c0_94 = arith.constant 0 : index
      %c0_95 = arith.constant 0 : index
      %89 = vector.load %arg5[%c0_94, %c0_95] : memref<8x1xf32, #tpu.memory_space<vmem>>, vector<8x1xf32>
      %90 = arith.mulf %88, %89 : vector<8x1xf32>
      %91 = arith.addf %86, %90 : vector<8x1xf32>
      %c0_96 = arith.constant 0 : index
      %c0_97 = arith.constant 0 : index
      %92 = vector.load %arg11[%c0_96, %c0_97] : memref<8x1xf32, #tpu.memory_space<vmem>>, vector<8x1xf32>
      tpu.vector_store %arg11[%c0_96, %c0_97], %91 {strides = array<i32>} : memref<8x1xf32, #tpu.memory_space<vmem>>, vector<8x1xf32>,
    } else {
    }
    %c0 = arith.constant 0 : index
    %c0_1 = arith.constant 0 : index
    %c0_2 = arith.constant 0 : index
    %3 = vector.load %arg8[%c0, %c0_1, %c0_2] : memref<1x4x384xbf16, #tpu.memory_space<vmem>>, vector<1x4x384xbf16>
    %4 = vector.shape_cast %3 : vector<1x4x384xbf16> to vector<4x384xbf16>
    %cst = arith.constant 0.000000e+00 : f32
    %5 = vector.broadcast %cst : f32 to vector<8x256xf32>
    %c0_3 = arith.constant 0 : index
    %c0_4 = arith.constant 0 : index
    %6 = vector.load %arg12[%c0_3, %c0_4] : memref<8x256xf32, #tpu.memory_space<vmem>>, vector<8x256xf32>
    tpu.vector_store %arg12[%c0_3, %c0_4], %5 {strides = array<i32>} : memref<8x256xf32, #tpu.memory_space<vmem>>, vector<8x256xf32>,
    %7 = vector.extract_strided_slice %4 {offsets = [0, 0], sizes = [4, 256], strides = [1, 1]} : vector<4x384xbf16> to vector<4x256xbf16>
    %c0_5 = arith.constant 0 : index
    %c0_6 = arith.constant 0 : index
    %8 = vector.load %arg12[%c0_5, %c0_6] : memref<8x256xf32, #tpu.memory_space<vmem>>, vector<8x256xf32>
    %c0_7 = arith.constant 0 : index
    %c0_8 = arith.constant 0 : index
    %c0_9 = arith.constant 0 : index
    %9 = vector.load %arg10[%c0_7, %c0_8, %c0_9] : memref<9x8x4xbf16, #tpu.memory_space<vmem>>, vector<1x8x4xbf16>
    %10 = vector.shape_cast %9 : vector<1x8x4xbf16> to vector<8x4xbf16>
    %cst_10 = arith.constant dense<0.000000e+00> : vector<8x256xf32>
    %11 = tpu.matmul %10, %7, %cst_10 {dimension_numbers = #tpu.dot_dimension_numbers<[1], [0], [0], [1], [0, 0, 1, 1], [], []>} : vector<8x4xbf16>, vector<4x256xbf16>, vector<8x256xf32> -> vector<8x256xf32>
    %12 = arith.addf %8, %11 : vector<8x256xf32>
    %c0_11 = arith.constant 0 : index
    %c0_12 = arith.constant 0 : index
    %13 = vector.load %arg12[%c0_11, %c0_12] : memref<8x256xf32, #tpu.memory_space<vmem>>, vector<8x256xf32>
    tpu.vector_store %arg12[%c0_11, %c0_12], %12 {strides = array<i32>} : memref<8x256xf32, #tpu.memory_space<vmem>>, vector<8x256xf32>,
    %14 = vector.extract_strided_slice %4 {offsets = [0, 1], sizes = [4, 256], strides = [1, 1]} : vector<4x384xbf16> to vector<4x256xbf16>
    %c0_13 = arith.constant 0 : index
    %c0_14 = arith.constant 0 : index
    %15 = vector.load %arg12[%c0_13, %c0_14] : memref<8x256xf32, #tpu.memory_space<vmem>>, vector<8x256xf32>
    %c1 = arith.constant 1 : index
    %c0_15 = arith.constant 0 : index
    %c0_16 = arith.constant 0 : index
    %16 = vector.load %arg10[%c1, %c0_15, %c0_16] : memref<9x8x4xbf16, #tpu.memory_space<vmem>>, vector<1x8x4xbf16>
    %17 = vector.shape_cast %16 : vector<1x8x4xbf16> to vector<8x4xbf16>
    %cst_17 = arith.constant dense<0.000000e+00> : vector<8x256xf32>
    %18 = tpu.matmul %17, %14, %cst_17 {dimension_numbers = #tpu.dot_dimension_numbers<[1], [0], [0], [1], [0, 0, 1, 1], [], []>} : vector<8x4xbf16>, vector<4x256xbf16>, vector<8x256xf32> -> vector<8x256xf32>
    %19 = arith.addf %15, %18 : vector<8x256xf32>
    %c0_18 = arith.constant 0 : index
    %c0_19 = arith.constant 0 : index
    %20 = vector.load %arg12[%c0_18, %c0_19] : memref<8x256xf32, #tpu.memory_space<vmem>>, vector<8x256xf32>
    tpu.vector_store %arg12[%c0_18, %c0_19], %19 {strides = array<i32>} : memref<8x256xf32, #tpu.memory_space<vmem>>, vector<8x256xf32>,
    %21 = vector.extract_strided_slice %4 {offsets = [0, 2], sizes = [4, 256], strides = [1, 1]} : vector<4x384xbf16> to vector<4x256xbf16>
    %c0_20 = arith.constant 0 : index
    %c0_21 = arith.constant 0 : index
    %22 = vector.load %arg12[%c0_20, %c0_21] : memref<8x256xf32, #tpu.memory_space<vmem>>, vector<8x256xf32>
    %c2 = arith.constant 2 : index
    %c0_22 = arith.constant 0 : index
    %c0_23 = arith.constant 0 : index
    %23 = vector.load %arg10[%c2, %c0_22, %c0_23] : memref<9x8x4xbf16, #tpu.memory_space<vmem>>, vector<1x8x4xbf16>
    %24 = vector.shape_cast %23 : vector<1x8x4xbf16> to vector<8x4xbf16>
    %cst_24 = arith.constant dense<0.000000e+00> : vector<8x256xf32>
    %25 = tpu.matmul %24, %21, %cst_24 {dimension_numbers = #tpu.dot_dimension_numbers<[1], [0], [0], [1], [0, 0, 1, 1], [], []>} : vector<8x4xbf16>, vector<4x256xbf16>, vector<8x256xf32> -> vector<8x256xf32>
    %26 = arith.addf %22, %25 : vector<8x256xf32>
    %c0_25 = arith.constant 0 : index
    %c0_26 = arith.constant 0 : index
    %27 = vector.load %arg12[%c0_25, %c0_26] : memref<8x256xf32, #tpu.memory_space<vmem>>, vector<8x256xf32>
    tpu.vector_store %arg12[%c0_25, %c0_26], %26 {strides = array<i32>} : memref<8x256xf32, #tpu.memory_space<vmem>>, vector<8x256xf32>,
    %28 = vector.extract_strided_slice %4 {offsets = [0, 16], sizes = [4, 256], strides = [1, 1]} : vector<4x384xbf16> to vector<4x256xbf16>
    %c0_27 = arith.constant 0 : index
    %c0_28 = arith.constant 0 : index
    %29 = vector.load %arg12[%c0_27, %c0_28] : memref<8x256xf32, #tpu.memory_space<vmem>>, vector<8x256xf32>
    %c3 = arith.constant 3 : index
    %c0_29 = arith.constant 0 : index
    %c0_30 = arith.constant 0 : index
    %30 = vector.load %arg10[%c3, %c0_29, %c0_30] : memref<9x8x4xbf16, #tpu.memory_space<vmem>>, vector<1x8x4xbf16>
    %31 = vector.shape_cast %30 : vector<1x8x4xbf16> to vector<8x4xbf16>
    %cst_31 = arith.constant dense<0.000000e+00> : vector<8x256xf32>
    %32 = tpu.matmul %31, %28, %cst_31 {dimension_numbers = #tpu.dot_dimension_numbers<[1], [0], [0], [1], [0, 0, 1, 1], [], []>} : vector<8x4xbf16>, vector<4x256xbf16>, vector<8x256xf32> -> vector<8x256xf32>
    %33 = arith.addf %29, %32 : vector<8x256xf32>
    %c0_32 = arith.constant 0 : index
    %c0_33 = arith.constant 0 : index
    %34 = vector.load %arg12[%c0_32, %c0_33] : memref<8x256xf32, #tpu.memory_space<vmem>>, vector<8x256xf32>
    tpu.vector_store %arg12[%c0_32, %c0_33], %33 {strides = array<i32>} : memref<8x256xf32, #tpu.memory_space<vmem>>, vector<8x256xf32>,
    %35 = vector.extract_strided_slice %4 {offsets = [0, 17], sizes = [4, 256], strides = [1, 1]} : vector<4x384xbf16> to vector<4x256xbf16>
    %c0_34 = arith.constant 0 : index
    %c0_35 = arith.constant 0 : index
    %36 = vector.load %arg12[%c0_34, %c0_35] : memref<8x256xf32, #tpu.memory_space<vmem>>, vector<8x256xf32>
    %c4 = arith.constant 4 : index
    %c0_36 = arith.constant 0 : index
    %c0_37 = arith.constant 0 : index
    %37 = vector.load %arg10[%c4, %c0_36, %c0_37] : memref<9x8x4xbf16, #tpu.memory_space<vmem>>, vector<1x8x4xbf16>
    %38 = vector.shape_cast %37 : vector<1x8x4xbf16> to vector<8x4xbf16>
    %cst_38 = arith.constant dense<0.000000e+00> : vector<8x256xf32>
    %39 = tpu.matmul %38, %35, %cst_38 {dimension_numbers = #tpu.dot_dimension_numbers<[1], [0], [0], [1], [0, 0, 1, 1], [], []>} : vector<8x4xbf16>, vector<4x256xbf16>, vector<8x256xf32> -> vector<8x256xf32>
    %40 = arith.addf %36, %39 : vector<8x256xf32>
    %c0_39 = arith.constant 0 : index
    %c0_40 = arith.constant 0 : index
    %41 = vector.load %arg12[%c0_39, %c0_40] : memref<8x256xf32, #tpu.memory_space<vmem>>, vector<8x256xf32>
    tpu.vector_store %arg12[%c0_39, %c0_40], %40 {strides = array<i32>} : memref<8x256xf32, #tpu.memory_space<vmem>>, vector<8x256xf32>,
    %42 = vector.extract_strided_slice %4 {offsets = [0, 18], sizes = [4, 256], strides = [1, 1]} : vector<4x384xbf16> to vector<4x256xbf16>
    %c0_41 = arith.constant 0 : index
    %c0_42 = arith.constant 0 : index
    %43 = vector.load %arg12[%c0_41, %c0_42] : memref<8x256xf32, #tpu.memory_space<vmem>>, vector<8x256xf32>
    %c5 = arith.constant 5 : index
    %c0_43 = arith.constant 0 : index
    %c0_44 = arith.constant 0 : index
    %44 = vector.load %arg10[%c5, %c0_43, %c0_44] : memref<9x8x4xbf16, #tpu.memory_space<vmem>>, vector<1x8x4xbf16>
    %45 = vector.shape_cast %44 : vector<1x8x4xbf16> to vector<8x4xbf16>
    %cst_45 = arith.constant dense<0.000000e+00> : vector<8x256xf32>
    %46 = tpu.matmul %45, %42, %cst_45 {dimension_numbers = #tpu.dot_dimension_numbers<[1], [0], [0], [1], [0, 0, 1, 1], [], []>} : vector<8x4xbf16>, vector<4x256xbf16>, vector<8x256xf32> -> vector<8x256xf32>
    %47 = arith.addf %43, %46 : vector<8x256xf32>
    %c0_46 = arith.constant 0 : index
    %c0_47 = arith.constant 0 : index
    %48 = vector.load %arg12[%c0_46, %c0_47] : memref<8x256xf32, #tpu.memory_space<vmem>>, vector<8x256xf32>
    tpu.vector_store %arg12[%c0_46, %c0_47], %47 {strides = array<i32>} : memref<8x256xf32, #tpu.memory_space<vmem>>, vector<8x256xf32>,
    %49 = vector.extract_strided_slice %4 {offsets = [0, 32], sizes = [4, 256], strides = [1, 1]} : vector<4x384xbf16> to vector<4x256xbf16>
    %c0_48 = arith.constant 0 : index
    %c0_49 = arith.constant 0 : index
    %50 = vector.load %arg12[%c0_48, %c0_49] : memref<8x256xf32, #tpu.memory_space<vmem>>, vector<8x256xf32>
    %c6 = arith.constant 6 : index
    %c0_50 = arith.constant 0 : index
    %c0_51 = arith.constant 0 : index
    %51 = vector.load %arg10[%c6, %c0_50, %c0_51] : memref<9x8x4xbf16, #tpu.memory_space<vmem>>, vector<1x8x4xbf16>
    %52 = vector.shape_cast %51 : vector<1x8x4xbf16> to vector<8x4xbf16>
    %cst_52 = arith.constant dense<0.000000e+00> : vector<8x256xf32>
    %53 = tpu.matmul %52, %49, %cst_52 {dimension_numbers = #tpu.dot_dimension_numbers<[1], [0], [0], [1], [0, 0, 1, 1], [], []>} : vector<8x4xbf16>, vector<4x256xbf16>, vector<8x256xf32> -> vector<8x256xf32>
    %54 = arith.addf %50, %53 : vector<8x256xf32>
    %c0_53 = arith.constant 0 : index
    %c0_54 = arith.constant 0 : index
    %55 = vector.load %arg12[%c0_53, %c0_54] : memref<8x256xf32, #tpu.memory_space<vmem>>, vector<8x256xf32>
    tpu.vector_store %arg12[%c0_53, %c0_54], %54 {strides = array<i32>} : memref<8x256xf32, #tpu.memory_space<vmem>>, vector<8x256xf32>,
    %56 = vector.extract_strided_slice %4 {offsets = [0, 33], sizes = [4, 256], strides = [1, 1]} : vector<4x384xbf16> to vector<4x256xbf16>
    %c0_55 = arith.constant 0 : index
    %c0_56 = arith.constant 0 : index
    %57 = vector.load %arg12[%c0_55, %c0_56] : memref<8x256xf32, #tpu.memory_space<vmem>>, vector<8x256xf32>
    %c7 = arith.constant 7 : index
    %c0_57 = arith.constant 0 : index
    %c0_58 = arith.constant 0 : index
    %58 = vector.load %arg10[%c7, %c0_57, %c0_58] : memref<9x8x4xbf16, #tpu.memory_space<vmem>>, vector<1x8x4xbf16>
    %59 = vector.shape_cast %58 : vector<1x8x4xbf16> to vector<8x4xbf16>
    %cst_59 = arith.constant dense<0.000000e+00> : vector<8x256xf32>
    %60 = tpu.matmul %59, %56, %cst_59 {dimension_numbers = #tpu.dot_dimension_numbers<[1], [0], [0], [1], [0, 0, 1, 1], [], []>} : vector<8x4xbf16>, vector<4x256xbf16>, vector<8x256xf32> -> vector<8x256xf32>
    %61 = arith.addf %57, %60 : vector<8x256xf32>
    %c0_60 = arith.constant 0 : index
    %c0_61 = arith.constant 0 : index
    %62 = vector.load %arg12[%c0_60, %c0_61] : memref<8x256xf32, #tpu.memory_space<vmem>>, vector<8x256xf32>
    tpu.vector_store %arg12[%c0_60, %c0_61], %61 {strides = array<i32>} : memref<8x256xf32, #tpu.memory_space<vmem>>, vector<8x256xf32>,
    %63 = vector.extract_strided_slice %4 {offsets = [0, 34], sizes = [4, 256], strides = [1, 1]} : vector<4x384xbf16> to vector<4x256xbf16>
    %c0_62 = arith.constant 0 : index
    %c0_63 = arith.constant 0 : index
    %64 = vector.load %arg12[%c0_62, %c0_63] : memref<8x256xf32, #tpu.memory_space<vmem>>, vector<8x256xf32>
    %c8 = arith.constant 8 : index
    %c0_64 = arith.constant 0 : index
    %c0_65 = arith.constant 0 : index
    %65 = vector.load %arg10[%c8, %c0_64, %c0_65] : memref<9x8x4xbf16, #tpu.memory_space<vmem>>, vector<1x8x4xbf16>
    %66 = vector.shape_cast %65 : vector<1x8x4xbf16> to vector<8x4xbf16>
    %cst_66 = arith.constant dense<0.000000e+00> : vector<8x256xf32>
    %67 = tpu.matmul %66, %63, %cst_66 {dimension_numbers = #tpu.dot_dimension_numbers<[1], [0], [0], [1], [0, 0, 1, 1], [], []>} : vector<8x4xbf16>, vector<4x256xbf16>, vector<8x256xf32> -> vector<8x256xf32>
    %68 = arith.addf %64, %67 : vector<8x256xf32>
    %c0_67 = arith.constant 0 : index
    %c0_68 = arith.constant 0 : index
    %69 = vector.load %arg12[%c0_67, %c0_68] : memref<8x256xf32, #tpu.memory_space<vmem>>, vector<8x256xf32>
    tpu.vector_store %arg12[%c0_67, %c0_68], %68 {strides = array<i32>} : memref<8x256xf32, #tpu.memory_space<vmem>>, vector<8x256xf32>,
    %c0_69 = arith.constant 0 : index
    %c0_70 = arith.constant 0 : index
    %70 = vector.load %arg12[%c0_69, %c0_70] : memref<8x256xf32, #tpu.memory_space<vmem>>, vector<8x256xf32>
    %c0_71 = arith.constant 0 : index
    %c0_72 = arith.constant 0 : index
    %71 = vector.load %arg11[%c0_71, %c0_72] : memref<8x1xf32, #tpu.memory_space<vmem>>, vector<8x1xf32>
    %72 = vector.broadcast %71 : vector<8x1xf32> to vector<8x256xf32>
    %73 = arith.addf %70, %72 : vector<8x256xf32>
    %c0_73 = arith.constant 0 : index
    %c0_74 = arith.constant 0 : index
    %c0_75 = arith.constant 0 : index
    %74 = vector.load %arg9[%c0_73, %c0_74, %c0_75] : memref<1x8x256xf32, #tpu.memory_space<vmem>>, vector<1x8x256xf32>
    %75 = vector.shape_cast %74 : vector<1x8x256xf32> to vector<8x256xf32>
    %76 = vector.shape_cast %73 : vector<8x256xf32> to vector<1x8x256xf32>
    tpu.vector_store %arg9[%c0_73, %c0_74, %c0_75], %76 {strides = array<i32>} : memref<1x8x256xf32, #tpu.memory_space<vmem>>, vector<1x8x256xf32>,
    return
  }
  func.func @transform_0(%arg0: i32, %arg1: i32) -> (i32, i32, i32) {
    %c0_i32 = arith.constant 0 : i32
    %c0_i32_0 = arith.constant 0 : i32
    %c0_i32_1 = arith.constant 0 : i32
    %c0_i32_2 = arith.constant 0 : i32
    return %c0_i32, %c0_i32_0, %c0_i32_1 : i32, i32, i32
  }
  func.func @transform_1(%arg0: i32, %arg1: i32) -> (i32, i32, i32) {
    %c0_i32 = arith.constant 0 : i32
    %c0_i32_0 = arith.constant 0 : i32
    %c0_i32_1 = arith.constant 0 : i32
    %c0_i32_2 = arith.constant 0 : i32
    return %c0_i32, %c0_i32_0, %c0_i32_1 : i32, i32, i32
  }
  func.func @transform_2(%arg0: i32, %arg1: i32) -> (i32, i32) {
    %c0_i32 = arith.constant 0 : i32
    %c0_i32_0 = arith.constant 0 : i32
    %c0_i32_1 = arith.constant 0 : i32
    return %c0_i32, %c0_i32_0 : i32, i32
  }
  func.func @transform_3(%arg0: i32, %arg1: i32) -> (i32, i32) {
    %c0_i32 = arith.constant 0 : i32
    %c0_i32_0 = arith.constant 0 : i32
    %c0_i32_1 = arith.constant 0 : i32
    return %c0_i32, %c0_i32_0 : i32, i32
  }
  func.func @transform_4(%arg0: i32, %arg1: i32) -> (i32, i32, i32, i32) {
    %c0_i32 = arith.constant 0 : i32
    %c0_i32_0 = arith.constant 0 : i32
    %c0_i32_1 = arith.constant 0 : i32
    %c0_i32_2 = arith.constant 0 : i32
    return %arg0, %c0_i32, %c0_i32_0, %c0_i32_1 : i32, i32, i32, i32
  }
  func.func @transform_5(%arg0: i32, %arg1: i32) -> (i32, i32, i32) {
    %c0_i32 = arith.constant 0 : i32
    %c0_i32_0 = arith.constant 0 : i32
    %c0_i32_1 = arith.constant 0 : i32
    return %arg0, %c0_i32, %c0_i32_0 : i32, i32, i32
  }
  func.func @transform_6(%arg0: i32, %arg1: i32) -> (i32, i32, i32) {
    %c0_i32 = arith.constant 0 : i32
    %c0_i32_0 = arith.constant 0 : i32
    %c0_i32_1 = arith.constant 0 : i32
    return %arg0, %c0_i32, %c0_i32_0 : i32, i32, i32
  }
  func.func @transform_7(%arg0: i32, %arg1: i32) -> (i32, i32, i32) {
    %c0_i32 = arith.constant 0 : i32
    %c0_i32_0 = arith.constant 0 : i32
    return %arg0, %c0_i32, %arg1 : i32, i32, i32
  }
}

module attributes {stable_mosaic.version = 11 : i64} {
  func.func @_bnn_conv_kernel(%arg0: i32, %arg1: i32, %arg2: memref<9x8x4xf32, #tpu.memory_space<vmem>>, %arg3: memref<9x8x4xf32, #tpu.memory_space<vmem>>, %arg4: memref<8x1xf32, #tpu.memory_space<vmem>>, %arg5: memref<8x1xf32, #tpu.memory_space<vmem>>, %arg6: memref<1x9x8x4xbf16, #tpu.memory_space<vmem>>, %arg7: memref<1x8x1xf32, #tpu.memory_space<vmem>>, %arg8: memref<1x4x384xbf16, #tpu.memory_space<vmem>>, %arg9: memref<1x8x256xf32, #tpu.memory_space<vmem>>, %arg10: memref<9x8x4xbf16, #tpu.memory_space<vmem>>, %arg11: memref<8x1xf32, #tpu.memory_space<vmem>>, %arg12: memref<8x256xf32, #tpu.memory_space<vmem>>) attributes {dimension_semantics = [#tpu.dimension_semantics<parallel>, #tpu.dimension_semantics<arbitrary>], iteration_bounds = array<i64: 2, 1>, scalar_prefetch = 0 : i64, scratch_operands = 3 : i64, tpu.core_type = #tpu.core_type<tc>, window_params = [{pipeline_mode = #tpu.pipeline_mode<synchronous>, transform_indices = @transform_0, window_bounds = array<i64: 9, 8, 4>}, {pipeline_mode = #tpu.pipeline_mode<synchronous>, transform_indices = @transform_1, window_bounds = array<i64: 9, 8, 4>}, {pipeline_mode = #tpu.pipeline_mode<synchronous>, transform_indices = @transform_2, window_bounds = array<i64: 8, 1>}, {pipeline_mode = #tpu.pipeline_mode<synchronous>, transform_indices = @transform_3, window_bounds = array<i64: 8, 1>}, {transform_indices = @transform_4, window_bounds = array<i64: 1, 9, 8, 4>}, {transform_indices = @transform_5, window_bounds = array<i64: 1, 8, 1>}, {transform_indices = @transform_6, window_bounds = array<i64: 1, 4, 384>}, {transform_indices = @transform_7, window_bounds = array<i64: 1, 8, 256>}]} {
    %c0_i32 = arith.constant 0 : i32
    %0 = arith.cmpi eq, %arg1, %c0_i32 : i32
    %1 = arith.extui %0 : i1 to i32
    %c0_i32_0 = arith.constant 0 : i32
    %2 = arith.cmpi ne, %1, %c0_i32_0 : i32
    scf.if %2 {
      %c0_76 = arith.constant 0 : index
      %c0_77 = arith.constant 0 : index
      %c0_78 = arith.constant 0 : index
      %77 = vector.load %arg2[%c0_76, %c0_77, %c0_78] : memref<9x8x4xf32, #tpu.memory_space<vmem>>, vector<9x8x4xf32>
      %c0_79 = arith.constant 0 : index
      %c0_80 = arith.constant 0 : index
      %c0_81 = arith.constant 0 : index
      %c0_82 = arith.constant 0 : index
      %78 = vector.load %arg6[%c0_79, %c0_80, %c0_81, %c0_82] : memref<1x9x8x4xbf16, #tpu.memory_space<vmem>>, vector<1x9x8x4xbf16>
      %79 = vector.shape_cast %78 : vector<1x9x8x4xbf16> to vector<9x8x4xbf16>
      %80 = arith.extf %79 : vector<9x8x4xbf16> to vector<9x8x4xf32>
      %c0_83 = arith.constant 0 : index
      %c0_84 = arith.constant 0 : index
      %c0_85 = arith.constant 0 : index
      %81 = vector.load %arg3[%c0_83, %c0_84, %c0_85] : memref<9x8x4xf32, #tpu.memory_space<vmem>>, vector<9x8x4xf32>
      %82 = arith.mulf %80, %81 : vector<9x8x4xf32>
      %83 = arith.addf %77, %82 : vector<9x8x4xf32>
      %84 = arith.truncf %83 : vector<9x8x4xf32> to vector<9x8x4xbf16>
      %c0_86 = arith.constant 0 : index
      %c0_87 = arith.constant 0 : index
      %c0_88 = arith.constant 0 : index
      %85 = vector.load %arg10[%c0_86, %c0_87, %c0_88] : memref<9x8x4xbf16, #tpu.memory_space<vmem>>, vector<9x8x4xbf16>
      tpu.vector_store %arg10[%c0_86, %c0_87, %c0_88], %84 {strides = array<i32>} : memref<9x8x4xbf16, #tpu.memory_space<vmem>>, vector<9x8x4xbf16>,
      %c0_89 = arith.constant 0 : index
      %c0_90 = arith.constant 0 : index
      %86 = vector.load %arg4[%c0_89, %c0_90] : memref<8x1xf32, #tpu.memory_space<vmem>>, vector<8x1xf32>
      %c0_91 = arith.constant 0 : index
      %c0_92 = arith.constant 0 : index
      %c0_93 = arith.constant 0 : index
      %87 = vector.load %arg7[%c0_91, %c0_92, %c0_93] : memref<1x8x1xf32, #tpu.memory_space<vmem>>, vector<1x8x1xf32>
      %88 = vector.shape_cast %87 : vector<1x8x1xf32> to vector<8x1xf32>
      %c0_94 = arith.constant 0 : index
      %c0_95 = arith.constant 0 : index
      %89 = vector.load %arg5[%c0_94, %c0_95] : memref<8x1xf32, #tpu.memory_space<vmem>>, vector<8x1xf32>
      %90 = arith.mulf %88, %89 : vector<8x1xf32>
      %91 = arith.addf %86, %90 : vector<8x1xf32>
      %c0_96 = arith.constant 0 : index
      %c0_97 = arith.constant 0 : index
      %92 = vector.load %arg11[%c0_96, %c0_97] : memref<8x1xf32, #tpu.memory_space<vmem>>, vector<8x1xf32>
      tpu.vector_store %arg11[%c0_96, %c0_97], %91 {strides = array<i32>} : memref<8x1xf32, #tpu.memory_space<vmem>>, vector<8x1xf32>,
    } else {
    }
    %c0 = arith.constant 0 : index
    %c0_1 = arith.constant 0 : index
    %c0_2 = arith.constant 0 : index
    %3 = vector.load %arg8[%c0, %c0_1, %c0_2] : memref<1x4x384xbf16, #tpu.memory_space<vmem>>, vector<1x4x384xbf16>
    %4 = vector.shape_cast %3 : vector<1x4x384xbf16> to vector<4x384xbf16>
    %cst = arith.constant 0.000000e+00 : f32
    %5 = vector.broadcast %cst : f32 to vector<8x256xf32>
    %c0_3 = arith.constant 0 : index
    %c0_4 = arith.constant 0 : index
    %6 = vector.load %arg12[%c0_3, %c0_4] : memref<8x256xf32, #tpu.memory_space<vmem>>, vector<8x256xf32>
    tpu.vector_store %arg12[%c0_3, %c0_4], %5 {strides = array<i32>} : memref<8x256xf32, #tpu.memory_space<vmem>>, vector<8x256xf32>,
    %7 = vector.extract_strided_slice %4 {offsets = [0, 0], sizes = [4, 256], strides = [1, 1]} : vector<4x384xbf16> to vector<4x256xbf16>
    %c0_5 = arith.constant 0 : index
    %c0_6 = arith.constant 0 : index
    %8 = vector.load %arg12[%c0_5, %c0_6] : memref<8x256xf32, #tpu.memory_space<vmem>>, vector<8x256xf32>
    %c0_7 = arith.constant 0 : index
    %c0_8 = arith.constant 0 : index
    %c0_9 = arith.constant 0 : index
    %9 = vector.load %arg10[%c0_7, %c0_8, %c0_9] : memref<9x8x4xbf16, #tpu.memory_space<vmem>>, vector<1x8x4xbf16>
    %10 = vector.shape_cast %9 : vector<1x8x4xbf16> to vector<8x4xbf16>
    %cst_10 = arith.constant dense<0.000000e+00> : vector<8x256xf32>
    %11 = tpu.matmul %10, %7, %cst_10 {dimension_numbers = #tpu.dot_dimension_numbers<[1], [0], [0], [1], [0, 0, 1, 1], [], []>} : vector<8x4xbf16>, vector<4x256xbf16>, vector<8x256xf32> -> vector<8x256xf32>
    %12 = arith.addf %8, %11 : vector<8x256xf32>
    %c0_11 = arith.constant 0 : index
    %c0_12 = arith.constant 0 : index
    %13 = vector.load %arg12[%c0_11, %c0_12] : memref<8x256xf32, #tpu.memory_space<vmem>>, vector<8x256xf32>
    tpu.vector_store %arg12[%c0_11, %c0_12], %12 {strides = array<i32>} : memref<8x256xf32, #tpu.memory_space<vmem>>, vector<8x256xf32>,
    %14 = vector.extract_strided_slice %4 {offsets = [0, 1], sizes = [4, 256], strides = [1, 1]} : vector<4x384xbf16> to vector<4x256xbf16>
    %c0_13 = arith.constant 0 : index
    %c0_14 = arith.constant 0 : index
    %15 = vector.load %arg12[%c0_13, %c0_14] : memref<8x256xf32, #tpu.memory_space<vmem>>, vector<8x256xf32>
    %c1 = arith.constant 1 : index
    %c0_15 = arith.constant 0 : index
    %c0_16 = arith.constant 0 : index
    %16 = vector.load %arg10[%c1, %c0_15, %c0_16] : memref<9x8x4xbf16, #tpu.memory_space<vmem>>, vector<1x8x4xbf16>
    %17 = vector.shape_cast %16 : vector<1x8x4xbf16> to vector<8x4xbf16>
    %cst_17 = arith.constant dense<0.000000e+00> : vector<8x256xf32>
    %18 = tpu.matmul %17, %14, %cst_17 {dimension_numbers = #tpu.dot_dimension_numbers<[1], [0], [0], [1], [0, 0, 1, 1], [], []>} : vector<8x4xbf16>, vector<4x256xbf16>, vector<8x256xf32> -> vector<8x256xf32>
    %19 = arith.addf %15, %18 : vector<8x256xf32>
    %c0_18 = arith.constant 0 : index
    %c0_19 = arith.constant 0 : index
    %20 = vector.load %arg12[%c0_18, %c0_19] : memref<8x256xf32, #tpu.memory_space<vmem>>, vector<8x256xf32>
    tpu.vector_store %arg12[%c0_18, %c0_19], %19 {strides = array<i32>} : memref<8x256xf32, #tpu.memory_space<vmem>>, vector<8x256xf32>,
    %21 = vector.extract_strided_slice %4 {offsets = [0, 2], sizes = [4, 256], strides = [1, 1]} : vector<4x384xbf16> to vector<4x256xbf16>
    %c0_20 = arith.constant 0 : index
    %c0_21 = arith.constant 0 : index
    %22 = vector.load %arg12[%c0_20, %c0_21] : memref<8x256xf32, #tpu.memory_space<vmem>>, vector<8x256xf32>
    %c2 = arith.constant 2 : index
    %c0_22 = arith.constant 0 : index
    %c0_23 = arith.constant 0 : index
    %23 = vector.load %arg10[%c2, %c0_22, %c0_23] : memref<9x8x4xbf16, #tpu.memory_space<vmem>>, vector<1x8x4xbf16>
    %24 = vector.shape_cast %23 : vector<1x8x4xbf16> to vector<8x4xbf16>
    %cst_24 = arith.constant dense<0.000000e+00> : vector<8x256xf32>
    %25 = tpu.matmul %24, %21, %cst_24 {dimension_numbers = #tpu.dot_dimension_numbers<[1], [0], [0], [1], [0, 0, 1, 1], [], []>} : vector<8x4xbf16>, vector<4x256xbf16>, vector<8x256xf32> -> vector<8x256xf32>
    %26 = arith.addf %22, %25 : vector<8x256xf32>
    %c0_25 = arith.constant 0 : index
    %c0_26 = arith.constant 0 : index
    %27 = vector.load %arg12[%c0_25, %c0_26] : memref<8x256xf32, #tpu.memory_space<vmem>>, vector<8x256xf32>
    tpu.vector_store %arg12[%c0_25, %c0_26], %26 {strides = array<i32>} : memref<8x256xf32, #tpu.memory_space<vmem>>, vector<8x256xf32>,
    %28 = vector.extract_strided_slice %4 {offsets = [0, 16], sizes = [4, 256], strides = [1, 1]} : vector<4x384xbf16> to vector<4x256xbf16>
    %c0_27 = arith.constant 0 : index
    %c0_28 = arith.constant 0 : index
    %29 = vector.load %arg12[%c0_27, %c0_28] : memref<8x256xf32, #tpu.memory_space<vmem>>, vector<8x256xf32>
    %c3 = arith.constant 3 : index
    %c0_29 = arith.constant 0 : index
    %c0_30 = arith.constant 0 : index
    %30 = vector.load %arg10[%c3, %c0_29, %c0_30] : memref<9x8x4xbf16, #tpu.memory_space<vmem>>, vector<1x8x4xbf16>
    %31 = vector.shape_cast %30 : vector<1x8x4xbf16> to vector<8x4xbf16>
    %cst_31 = arith.constant dense<0.000000e+00> : vector<8x256xf32>
    %32 = tpu.matmul %31, %28, %cst_31 {dimension_numbers = #tpu.dot_dimension_numbers<[1], [0], [0], [1], [0, 0, 1, 1], [], []>} : vector<8x4xbf16>, vector<4x256xbf16>, vector<8x256xf32> -> vector<8x256xf32>
    %33 = arith.addf %29, %32 : vector<8x256xf32>
    %c0_32 = arith.constant 0 : index
    %c0_33 = arith.constant 0 : index
    %34 = vector.load %arg12[%c0_32, %c0_33] : memref<8x256xf32, #tpu.memory_space<vmem>>, vector<8x256xf32>
    tpu.vector_store %arg12[%c0_32, %c0_33], %33 {strides = array<i32>} : memref<8x256xf32, #tpu.memory_space<vmem>>, vector<8x256xf32>,
    %35 = vector.extract_strided_slice %4 {offsets = [0, 17], sizes = [4, 256], strides = [1, 1]} : vector<4x384xbf16> to vector<4x256xbf16>
    %c0_34 = arith.constant 0 : index
    %c0_35 = arith.constant 0 : index
    %36 = vector.load %arg12[%c0_34, %c0_35] : memref<8x256xf32, #tpu.memory_space<vmem>>, vector<8x256xf32>
    %c4 = arith.constant 4 : index
    %c0_36 = arith.constant 0 : index
    %c0_37 = arith.constant 0 : index
    %37 = vector.load %arg10[%c4, %c0_36, %c0_37] : memref<9x8x4xbf16, #tpu.memory_space<vmem>>, vector<1x8x4xbf16>
    %38 = vector.shape_cast %37 : vector<1x8x4xbf16> to vector<8x4xbf16>
    %cst_38 = arith.constant dense<0.000000e+00> : vector<8x256xf32>
    %39 = tpu.matmul %38, %35, %cst_38 {dimension_numbers = #tpu.dot_dimension_numbers<[1], [0], [0], [1], [0, 0, 1, 1], [], []>} : vector<8x4xbf16>, vector<4x256xbf16>, vector<8x256xf32> -> vector<8x256xf32>
    %40 = arith.addf %36, %39 : vector<8x256xf32>
    %c0_39 = arith.constant 0 : index
    %c0_40 = arith.constant 0 : index
    %41 = vector.load %arg12[%c0_39, %c0_40] : memref<8x256xf32, #tpu.memory_space<vmem>>, vector<8x256xf32>
    tpu.vector_store %arg12[%c0_39, %c0_40], %40 {strides = array<i32>} : memref<8x256xf32, #tpu.memory_space<vmem>>, vector<8x256xf32>,
    %42 = vector.extract_strided_slice %4 {offsets = [0, 18], sizes = [4, 256], strides = [1, 1]} : vector<4x384xbf16> to vector<4x256xbf16>
    %c0_41 = arith.constant 0 : index
    %c0_42 = arith.constant 0 : index
    %43 = vector.load %arg12[%c0_41, %c0_42] : memref<8x256xf32, #tpu.memory_space<vmem>>, vector<8x256xf32>
    %c5 = arith.constant 5 : index
    %c0_43 = arith.constant 0 : index
    %c0_44 = arith.constant 0 : index
    %44 = vector.load %arg10[%c5, %c0_43, %c0_44] : memref<9x8x4xbf16, #tpu.memory_space<vmem>>, vector<1x8x4xbf16>
    %45 = vector.shape_cast %44 : vector<1x8x4xbf16> to vector<8x4xbf16>
    %cst_45 = arith.constant dense<0.000000e+00> : vector<8x256xf32>
    %46 = tpu.matmul %45, %42, %cst_45 {dimension_numbers = #tpu.dot_dimension_numbers<[1], [0], [0], [1], [0, 0, 1, 1], [], []>} : vector<8x4xbf16>, vector<4x256xbf16>, vector<8x256xf32> -> vector<8x256xf32>
    %47 = arith.addf %43, %46 : vector<8x256xf32>
    %c0_46 = arith.constant 0 : index
    %c0_47 = arith.constant 0 : index
    %48 = vector.load %arg12[%c0_46, %c0_47] : memref<8x256xf32, #tpu.memory_space<vmem>>, vector<8x256xf32>
    tpu.vector_store %arg12[%c0_46, %c0_47], %47 {strides = array<i32>} : memref<8x256xf32, #tpu.memory_space<vmem>>, vector<8x256xf32>,
    %49 = vector.extract_strided_slice %4 {offsets = [0, 32], sizes = [4, 256], strides = [1, 1]} : vector<4x384xbf16> to vector<4x256xbf16>
    %c0_48 = arith.constant 0 : index
    %c0_49 = arith.constant 0 : index
    %50 = vector.load %arg12[%c0_48, %c0_49] : memref<8x256xf32, #tpu.memory_space<vmem>>, vector<8x256xf32>
    %c6 = arith.constant 6 : index
    %c0_50 = arith.constant 0 : index
    %c0_51 = arith.constant 0 : index
    %51 = vector.load %arg10[%c6, %c0_50, %c0_51] : memref<9x8x4xbf16, #tpu.memory_space<vmem>>, vector<1x8x4xbf16>
    %52 = vector.shape_cast %51 : vector<1x8x4xbf16> to vector<8x4xbf16>
    %cst_52 = arith.constant dense<0.000000e+00> : vector<8x256xf32>
    %53 = tpu.matmul %52, %49, %cst_52 {dimension_numbers = #tpu.dot_dimension_numbers<[1], [0], [0], [1], [0, 0, 1, 1], [], []>} : vector<8x4xbf16>, vector<4x256xbf16>, vector<8x256xf32> -> vector<8x256xf32>
    %54 = arith.addf %50, %53 : vector<8x256xf32>
    %c0_53 = arith.constant 0 : index
    %c0_54 = arith.constant 0 : index
    %55 = vector.load %arg12[%c0_53, %c0_54] : memref<8x256xf32, #tpu.memory_space<vmem>>, vector<8x256xf32>
    tpu.vector_store %arg12[%c0_53, %c0_54], %54 {strides = array<i32>} : memref<8x256xf32, #tpu.memory_space<vmem>>, vector<8x256xf32>,
    %56 = vector.extract_strided_slice %4 {offsets = [0, 33], sizes = [4, 256], strides = [1, 1]} : vector<4x384xbf16> to vector<4x256xbf16>
    %c0_55 = arith.constant 0 : index
    %c0_56 = arith.constant 0 : index
    %57 = vector.load %arg12[%c0_55, %c0_56] : memref<8x256xf32, #tpu.memory_space<vmem>>, vector<8x256xf32>
    %c7 = arith.constant 7 : index
    %c0_57 = arith.constant 0 : index
    %c0_58 = arith.constant 0 : index
    %58 = vector.load %arg10[%c7, %c0_57, %c0_58] : memref<9x8x4xbf16, #tpu.memory_space<vmem>>, vector<1x8x4xbf16>
    %59 = vector.shape_cast %58 : vector<1x8x4xbf16> to vector<8x4xbf16>
    %cst_59 = arith.constant dense<0.000000e+00> : vector<8x256xf32>
    %60 = tpu.matmul %59, %56, %cst_59 {dimension_numbers = #tpu.dot_dimension_numbers<[1], [0], [0], [1], [0, 0, 1, 1], [], []>} : vector<8x4xbf16>, vector<4x256xbf16>, vector<8x256xf32> -> vector<8x256xf32>
    %61 = arith.addf %57, %60 : vector<8x256xf32>
    %c0_60 = arith.constant 0 : index
    %c0_61 = arith.constant 0 : index
    %62 = vector.load %arg12[%c0_60, %c0_61] : memref<8x256xf32, #tpu.memory_space<vmem>>, vector<8x256xf32>
    tpu.vector_store %arg12[%c0_60, %c0_61], %61 {strides = array<i32>} : memref<8x256xf32, #tpu.memory_space<vmem>>, vector<8x256xf32>,
    %63 = vector.extract_strided_slice %4 {offsets = [0, 34], sizes = [4, 256], strides = [1, 1]} : vector<4x384xbf16> to vector<4x256xbf16>
    %c0_62 = arith.constant 0 : index
    %c0_63 = arith.constant 0 : index
    %64 = vector.load %arg12[%c0_62, %c0_63] : memref<8x256xf32, #tpu.memory_space<vmem>>, vector<8x256xf32>
    %c8 = arith.constant 8 : index
    %c0_64 = arith.constant 0 : index
    %c0_65 = arith.constant 0 : index
    %65 = vector.load %arg10[%c8, %c0_64, %c0_65] : memref<9x8x4xbf16, #tpu.memory_space<vmem>>, vector<1x8x4xbf16>
    %66 = vector.shape_cast %65 : vector<1x8x4xbf16> to vector<8x4xbf16>
    %cst_66 = arith.constant dense<0.000000e+00> : vector<8x256xf32>
    %67 = tpu.matmul %66, %63, %cst_66 {dimension_numbers = #tpu.dot_dimension_numbers<[1], [0], [0], [1], [0, 0, 1, 1], [], []>} : vector<8x4xbf16>, vector<4x256xbf16>, vector<8x256xf32> -> vector<8x256xf32>
    %68 = arith.addf %64, %67 : vector<8x256xf32>
    %c0_67 = arith.constant 0 : index
    %c0_68 = arith.constant 0 : index
    %69 = vector.load %arg12[%c0_67, %c0_68] : memref<8x256xf32, #tpu.memory_space<vmem>>, vector<8x256xf32>
    tpu.vector_store %arg12[%c0_67, %c0_68], %68 {strides = array<i32>} : memref<8x256xf32, #tpu.memory_space<vmem>>, vector<8x256xf32>,
    %c0_69 = arith.constant 0 : index
    %c0_70 = arith.constant 0 : index
    %70 = vector.load %arg12[%c0_69, %c0_70] : memref<8x256xf32, #tpu.memory_space<vmem>>, vector<8x256xf32>
    %c0_71 = arith.constant 0 : index
    %c0_72 = arith.constant 0 : index
    %71 = vector.load %arg11[%c0_71, %c0_72] : memref<8x1xf32, #tpu.memory_space<vmem>>, vector<8x1xf32>
    %72 = vector.broadcast %71 : vector<8x1xf32> to vector<8x256xf32>
    %73 = arith.addf %70, %72 : vector<8x256xf32>
    %c0_73 = arith.constant 0 : index
    %c0_74 = arith.constant 0 : index
    %c0_75 = arith.constant 0 : index
    %74 = vector.load %arg9[%c0_73, %c0_74, %c0_75] : memref<1x8x256xf32, #tpu.memory_space<vmem>>, vector<1x8x256xf32>
    %75 = vector.shape_cast %74 : vector<1x8x256xf32> to vector<8x256xf32>
    %76 = vector.shape_cast %73 : vector<8x256xf32> to vector<1x8x256xf32>
    tpu.vector_store %arg9[%c0_73, %c0_74, %c0_75], %76 {strides = array<i32>} : memref<1x8x256xf32, #tpu.memory_space<vmem>>, vector<1x8x256xf32>,
    return
  }
  func.func @transform_0(%arg0: i32, %arg1: i32) -> (i32, i32, i32) {
    %c0_i32 = arith.constant 0 : i32
    %c0_i32_0 = arith.constant 0 : i32
    %c0_i32_1 = arith.constant 0 : i32
    %c0_i32_2 = arith.constant 0 : i32
    return %c0_i32, %c0_i32_0, %c0_i32_1 : i32, i32, i32
  }
  func.func @transform_1(%arg0: i32, %arg1: i32) -> (i32, i32, i32) {
    %c0_i32 = arith.constant 0 : i32
    %c0_i32_0 = arith.constant 0 : i32
    %c0_i32_1 = arith.constant 0 : i32
    %c0_i32_2 = arith.constant 0 : i32
    return %c0_i32, %c0_i32_0, %c0_i32_1 : i32, i32, i32
  }
  func.func @transform_2(%arg0: i32, %arg1: i32) -> (i32, i32) {
    %c0_i32 = arith.constant 0 : i32
    %c0_i32_0 = arith.constant 0 : i32
    %c0_i32_1 = arith.constant 0 : i32
    return %c0_i32, %c0_i32_0 : i32, i32
  }
  func.func @transform_3(%arg0: i32, %arg1: i32) -> (i32, i32) {
    %c0_i32 = arith.constant 0 : i32
    %c0_i32_0 = arith.constant 0 : i32
    %c0_i32_1 = arith.constant 0 : i32
    return %c0_i32, %c0_i32_0 : i32, i32
  }
  func.func @transform_4(%arg0: i32, %arg1: i32) -> (i32, i32, i32, i32) {
    %c0_i32 = arith.constant 0 : i32
    %c0_i32_0 = arith.constant 0 : i32
    %c0_i32_1 = arith.constant 0 : i32
    %c0_i32_2 = arith.constant 0 : i32
    return %arg0, %c0_i32, %c0_i32_0, %c0_i32_1 : i32, i32, i32, i32
  }
  func.func @transform_5(%arg0: i32, %arg1: i32) -> (i32, i32, i32) {
    %c0_i32 = arith.constant 0 : i32
    %c0_i32_0 = arith.constant 0 : i32
    %c0_i32_1 = arith.constant 0 : i32
    return %arg0, %c0_i32, %c0_i32_0 : i32, i32, i32
  }
  func.func @transform_6(%arg0: i32, %arg1: i32) -> (i32, i32, i32) {
    %c0_i32 = arith.constant 0 : i32
    %c0_i32_0 = arith.constant 0 : i32
    %c0_i32_1 = arith.constant 0 : i32
    return %arg0, %c0_i32, %c0_i32_0 : i32, i32, i32
  }
  func.func @transform_7(%arg0: i32, %arg1: i32) -> (i32, i32, i32) {
    %c0_i32 = arith.constant 0 : i32
    %c0_i32_0 = arith.constant 0 : i32
    return %arg0, %c0_i32, %arg1 : i32, i32, i32
  }
}

</mosaic_0001>

<llo_original>
// kernel: tpu_custom_call.1
$region0: #{tpu_custom_call.1}
  #allocation0 [shape = 'u32[]', space=smem, size = 0x4, offset = 0x4, fixed_abs, tag = 'smem constant byte address 0x4 - core index']
  #allocation1 [shape = 'u32[144,128]{1,0:T(1,128)}', space=vmem, size = 0x12000, scoped, tag = 'internal scratch']
  #allocation2 [shape = 'bf16[9,8,4]{2,1,0:T(8,128)(2,1)}', space=vmem, size = 0x4800, scoped, tag = 'scratch operand']
  #allocation3 [shape = 'f32[8,1]{1,0:T(8,128)}', space=vmem, size = 0x1000, scoped, tag = 'scratch operand']
  #allocation4 [shape = 'f32[8,256]{1,0:T(8,128)}', space=vmem, size = 0x2000, scoped, tag = 'scratch operand']
  %s0 = inlined_call_operand.vmem [shape: f32[9,8,4], index: 0, kind: input, shape index: {}]
  %s1 = inlined_call_operand.vmem [shape: f32[9,8,4], index: 1, kind: input, shape index: {}]
  %s2 = inlined_call_operand.vmem [shape: f32[8,1], index: 2, kind: input, shape index: {}]
  %s3 = inlined_call_operand.vmem [shape: f32[8,1], index: 3, kind: input, shape index: {}]
  %s4 = inlined_call_operand.vmem [shape: bf16[2,9,8,4], index: 4, kind: input, shape index: {}]
  %s5 = inlined_call_operand.vmem [shape: f32[2,8,1], index: 5, kind: input, shape index: {}]
  %s6 = inlined_call_operand.vmem [shape: bf16[2,4,384], index: 6, kind: input, shape index: {}]
  %s7 = inlined_call_operand.hbm [shape: f32[2,8,256], index: 7, kind: output, shape index: {}]
  %s8 = sld [smem:[#allocation0]]
  $region65: #{tpu_custom_call.1} parent=0
    _
  %s10 = ssub.s32 1, %s8
  %s11 = scalar_select 0, %s10, %s8
  $region1: #{tpu_custom_call.1} parent=0
    #allocation5 [shape = 'u8[16384]{0}', space=vmem, size = 0x4000, scoped, tag = 'output window, operand 0']
    #allocation6 [shape = 's32[2]{0}', space=sflag, size = 0x8, scoped, tag = 'scoped memory for tpu_custom_call.1']
    %12 = vsyncpa [#allocation6], 0
    %s13 = scalar_lea.sflag [#allocation6], 1
    %14 = vsyncpa %s13, 0
    loop: start=0, step=1, limit=4
    $region2: #{tpu_custom_call.1} parent=1 // loop_pre_header
      _
    $region3: #{tpu_custom_call.1} parent=1 // loop_header
      %s16 = sphi 0, %s20
      %p17 = scmp.ge.s32.totalorder %s16, 4
      %s23 = sphi 0, %s35
      %s24 = sphi 0, %s31
      %s25 = sphi 0, %s23
      %s26 = sphi 0, %s24
      %s27 = sphi 0, %s25
      %s28 = sphi 0, %s26
      %s36 = sphi 0, %s36
      %s38 = sphi 0, %s36
      %s39 = sphi 0, %s38
      %s53 = sphi 0, %s39
      %s57 = sphi 0, %s57
      %s59 = sphi 0, %s57
      %s60 = sphi 0, %s59
      %s74 = sphi 0, %s60
      %s78 = sphi 0, %s78
      %s80 = sphi 0, %s78
      %s81 = sphi 0, %s80
      %s95 = sphi 0, %s81
      %s99 = sphi 0, %s99
      %s101 = sphi 0, %s99
      %s102 = sphi 0, %s101
      %s116 = sphi 0, %s102
      %s122 = sphi 0, %s124
      %s125 = sphi 0, %s122
      %s126 = sphi 0, %s125
      %s142 = sphi 0, %s126
      %s148 = sphi 0, %s150
      %s151 = sphi 0, %s148
      %s152 = sphi 0, %s151
      %s168 = sphi 0, %s152
      %s174 = sphi 0, %s176
      %s177 = sphi 0, %s174
      %s178 = sphi 0, %s177
      %s194 = sphi 0, %s178
      %s202 = sphi 0, %s204
      %s205 = sphi 0, %s202
      %s206 = sphi 0, %s205
      %s222 = sphi 0, %s206
    $region4: #{tpu_custom_call.1} parent=1 // loop_header_branch
      %19 = sbr.rel (%p17) target = $region8
    $region5: #{tpu_custom_call.1} parent=1 // loop_body
      %s21 = ssub.s32 %s16, 1
      %s22 = ssub.s32 %s16, 2
      %s29 = sadd.s32 1, %s24
      %p30 = scmp.ge.s32.totalorder %s29, 1
      %s31 = scalar_select %p30, 0, %s29
      %s32 = sadd.s32 1, %s23
      %s33 = scalar_select %p30, %s32, %s23
      %p34 = scmp.ge.s32.totalorder %s33, 2
      %s35 = scalar_select %p34, 0, %s33
      %s37 = sadd.s32 %s36, 1
      %p40 = scmp.eq.s32.totalorder %s16, 1
      %p41 = scmp.ne.s32.totalorder %s36, %s38
      %p42 = scmp.eq.s32.totalorder %s16, 0
      %p43 = por %p41, %p42
      %p44 = scmp.ne.s32.totalorder %s36, %s38
      %p45 = scmp.eq.s32.totalorder %s21, 1
      %p46 = por %p44, %p45
      %p47 = scmp.ne.s32.totalorder %s38, %s39
      %p48 = scmp.eq.s32.totalorder %s21, 0
      %p49 = por %p47, %p48
      %p50 = scmp.ne.s32.totalorder %s38, %s39
      %p51 = scmp.eq.s32.totalorder %s22, 1
      %p52 = por %p50, %p51
      %p54 = scmp.ne.s32.totalorder %s39, %s53
      %p55 = scmp.eq.s32.totalorder %s22, 0
      %p56 = por %p54, %p55
      %s58 = sadd.s32 %s57, 1
      %p61 = scmp.eq.s32.totalorder %s16, 1
      %p62 = scmp.ne.s32.totalorder %s57, %s59
      %p63 = scmp.eq.s32.totalorder %s16, 0
      %p64 = por %p62, %p63
      %p65 = scmp.ne.s32.totalorder %s57, %s59
      %p66 = scmp.eq.s32.totalorder %s21, 1
      %p67 = por %p65, %p66
      %p68 = scmp.ne.s32.totalorder %s59, %s60
      %p69 = scmp.eq.s32.totalorder %s21, 0
      %p70 = por %p68, %p69
      %p71 = scmp.ne.s32.totalorder %s59, %s60
      %p72 = scmp.eq.s32.totalorder %s22, 1
      %p73 = por %p71, %p72
      %p75 = scmp.ne.s32.totalorder %s60, %s74
      %p76 = scmp.eq.s32.totalorder %s22, 0
      %p77 = por %p75, %p76
      %s79 = sadd.s32 %s78, 1
      %p82 = scmp.eq.s32.totalorder %s16, 1
      %p83 = scmp.ne.s32.totalorder %s78, %s80
      %p84 = scmp.eq.s32.totalorder %s16, 0
      %p85 = por %p83, %p84
      %p86 = scmp.ne.s32.totalorder %s78, %s80
      %p87 = scmp.eq.s32.totalorder %s21, 1
      %p88 = por %p86, %p87
      %p89 = scmp.ne.s32.totalorder %s80, %s81
      %p90 = scmp.eq.s32.totalorder %s21, 0
      %p91 = por %p89, %p90
      %p92 = scmp.ne.s32.totalorder %s80, %s81
      %p93 = scmp.eq.s32.totalorder %s22, 1
      %p94 = por %p92, %p93
      %p96 = scmp.ne.s32.totalorder %s81, %s95
      %p97 = scmp.eq.s32.totalorder %s22, 0
      %p98 = por %p96, %p97
      %s100 = sadd.s32 %s99, 1
      %p103 = scmp.eq.s32.totalorder %s16, 1
      %p104 = scmp.ne.s32.totalorder %s99, %s101
      %p105 = scmp.eq.s32.totalorder %s16, 0
      %p106 = por %p104, %p105
      %p107 = scmp.ne.s32.totalorder %s99, %s101
      %p108 = scmp.eq.s32.totalorder %s21, 1
      %p109 = por %p107, %p108
      %p110 = scmp.ne.s32.totalorder %s101, %s102
      %p111 = scmp.eq.s32.totalorder %s21, 0
      %p112 = por %p110, %p111
      %p113 = scmp.ne.s32.totalorder %s101, %s102
      %p114 = scmp.eq.s32.totalorder %s22, 1
      %p115 = por %p113, %p114
      %p117 = scmp.ne.s32.totalorder %s102, %s116
      %p118 = scmp.eq.s32.totalorder %s22, 0
      %p119 = por %p117, %p118
      %s120 = ssub.s32 %s23, %s35
      %p121 = scmp.eq.s32.totalorder %s120, 0
      %s123 = sadd.s32 %s122, 1
      %s124 = scalar_select %p121, %s122, %s123
      %p127 = pneg %p121
      %p128 = scmp.eq.s32.totalorder %s16, 1
      %p129 = por %p127, %p128
      %p130 = scmp.ne.s32.totalorder %s122, %s125
      %p131 = scmp.eq.s32.totalorder %s16, 0
      %p132 = por %p130, %p131
      %p133 = scmp.ne.s32.totalorder %s122, %s125
      %p134 = scmp.eq.s32.totalorder %s21, 1
      %p135 = por %p133, %p134
      %p136 = scmp.ne.s32.totalorder %s125, %s126
      %p137 = scmp.eq.s32.totalorder %s21, 0
      %p138 = por %p136, %p137
      %p139 = scmp.ne.s32.totalorder %s125, %s126
      %p140 = scmp.eq.s32.totalorder %s22, 1
      %p141 = por %p139, %p140
      %p143 = scmp.ne.s32.totalorder %s126, %s142
      %p144 = scmp.eq.s32.totalorder %s22, 0
      %p145 = por %p143, %p144
      %s146 = ssub.s32 %s23, %s35
      %p147 = scmp.eq.s32.totalorder %s146, 0
      %s149 = sadd.s32 %s148, 1
      %s150 = scalar_select %p147, %s148, %s149
      %p153 = pneg %p147
      %p154 = scmp.eq.s32.totalorder %s16, 1
      %p155 = por %p153, %p154
      %p156 = scmp.ne.s32.totalorder %s148, %s151
      %p157 = scmp.eq.s32.totalorder %s16, 0
      %p158 = por %p156, %p157
      %p159 = scmp.ne.s32.totalorder %s148, %s151
      %p160 = scmp.eq.s32.totalorder %s21, 1
      %p161 = por %p159, %p160
      %p162 = scmp.ne.s32.totalorder %s151, %s152
      %p163 = scmp.eq.s32.totalorder %s21, 0
      %p164 = por %p162, %p163
      %p165 = scmp.ne.s32.totalorder %s151, %s152
      %p166 = scmp.eq.s32.totalorder %s22, 1
      %p167 = por %p165, %p166
      %p169 = scmp.ne.s32.totalorder %s152, %s168
      %p170 = scmp.eq.s32.totalorder %s22, 0
      %p171 = por %p169, %p170
      %s172 = ssub.s32 %s23, %s35
      %p173 = scmp.eq.s32.totalorder %s172, 0
      %s175 = sadd.s32 %s174, 1
      %s176 = scalar_select %p173, %s174, %s175
      %p179 = pneg %p173
      %p180 = scmp.eq.s32.totalorder %s16, 1
      %p181 = por %p179, %p180
      %p182 = scmp.ne.s32.totalorder %s174, %s177
      %p183 = scmp.eq.s32.totalorder %s16, 0
      %p184 = por %p182, %p183
      %p185 = scmp.ne.s32.totalorder %s174, %s177
      %p186 = scmp.eq.s32.totalorder %s21, 1
      %p187 = por %p185, %p186
      %p188 = scmp.ne.s32.totalorder %s177, %s178
      %p189 = scmp.eq.s32.totalorder %s21, 0
      %p190 = por %p188, %p189
      %p191 = scmp.ne.s32.totalorder %s177, %s178
      %p192 = scmp.eq.s32.totalorder %s22, 1
      %p193 = por %p191, %p192
      %p195 = scmp.ne.s32.totalorder %s178, %s194
      %p196 = scmp.eq.s32.totalorder %s22, 0
      %p197 = por %p195, %p196
      %s198 = ssub.s32 %s23, %s35
      %s199 = ssub.s32 %s24, %s31
      %s200 = sor.u32 %s198, %s199
      %p201 = scmp.eq.s32.totalorder %s200, 0
      %s203 = sadd.s32 %s202, 1
      %s204 = scalar_select %p201, %s202, %s203
      %p207 = pneg %p201
      %p208 = scmp.eq.s32.totalorder %s16, 1
      %p209 = por %p207, %p208
      %p210 = scmp.ne.s32.totalorder %s202, %s205
      %p211 = scmp.eq.s32.totalorder %s16, 0
      %p212 = por %p210, %p211
      %p213 = scmp.ne.s32.totalorder %s202, %s205
      %p214 = scmp.eq.s32.totalorder %s21, 1
      %p215 = por %p213, %p214
      %p216 = scmp.ne.s32.totalorder %s205, %s206
      %p217 = scmp.eq.s32.totalorder %s21, 0
      %p218 = por %p216, %p217
      %p219 = scmp.ne.s32.totalorder %s205, %s206
      %p220 = scmp.eq.s32.totalorder %s22, 1
      %p221 = por %p219, %p220
      %p223 = scmp.ne.s32.totalorder %s206, %s222
      %p224 = scmp.eq.s32.totalorder %s22, 0
      %p225 = por %p223, %p224
      %p226 = scmp.le.s32.totalorder 1, %s16
      %p227 = scmp.lt.s32.totalorder %s16, 3
      %p228 = pnand %p226, %p227
      %p229 = pneg %p228
      // Predicated region
      $region9: #{tpu_custom_call.1} parent=5 // pred_check
        _
      $region10: #{tpu_custom_call.1} parent=5 // pred_check_branch
        %231 = sbr.rel (%p228) target = $region12
      $region11: #{tpu_custom_call.1} parent=5 // pred_region
        %s232 = ssub.s32 %s16, 1
        // Predicated region
        $region13: #{tpu_custom_call.1} parent=11 // pred_check
          %p233 = pneg %p49
        $region14: #{tpu_custom_call.1} parent=11 // pred_check_branch
          %235 = sbr.rel (%p233) target = $region16
        $region15: #{tpu_custom_call.1} parent=11 // pred_region
          _
        $region16: #{tpu_custom_call.1} parent=11 // pred_fallthru
          _
        // Predicated region
        $region17: #{tpu_custom_call.1} parent=11 // pred_check
          %p236 = pneg %p70
        $region18: #{tpu_custom_call.1} parent=11 // pred_check_branch
          %238 = sbr.rel (%p236) target = $region20
        $region19: #{tpu_custom_call.1} parent=11 // pred_region
          _
        $region20: #{tpu_custom_call.1} parent=11 // pred_fallthru
          _
        // Predicated region
        $region21: #{tpu_custom_call.1} parent=11 // pred_check
          %p239 = pneg %p91
        $region22: #{tpu_custom_call.1} parent=11 // pred_check_branch
          %241 = sbr.rel (%p239) target = $region24
        $region23: #{tpu_custom_call.1} parent=11 // pred_region
          _
        $region24: #{tpu_custom_call.1} parent=11 // pred_fallthru
          _
        // Predicated region
        $region25: #{tpu_custom_call.1} parent=11 // pred_check
          %p242 = pneg %p112
        $region26: #{tpu_custom_call.1} parent=11 // pred_check_branch
          %244 = sbr.rel (%p242) target = $region28
        $region27: #{tpu_custom_call.1} parent=11 // pred_region
          _
        $region28: #{tpu_custom_call.1} parent=11 // pred_fallthru
          _
      $region12: #{tpu_custom_call.1} parent=5 // pred_fallthru
        _
      %p245 = scmp.lt.s32.totalorder %s16, 2
      // Predicated region
      $region29: #{tpu_custom_call.1} parent=5 // pred_check
        %p246 = pneg %p245
      $region30: #{tpu_custom_call.1} parent=5 // pred_check_branch
        %248 = sbr.rel (%p246) target = $region32
      $region31: #{tpu_custom_call.1} parent=5 // pred_region
        // Predicated region
        $region33: #{tpu_custom_call.1} parent=31 // pred_check
          %p249 = pneg %p132
        $region34: #{tpu_custom_call.1} parent=31 // pred_check_branch
          %251 = sbr.rel (%p249) target = $region36
        $region35: #{tpu_custom_call.1} parent=31 // pred_region
          %p252 = scmp.lt.s32.totalorder %s23, 1
          %s253 = scalar_select %p252, %s23, 1
          %s254 = smul.addr %s253, 9
          %s255 = smul.addr %s254, 4
          %s256 = scalar_lea.vmem %s4, %s255
        $region36: #{tpu_custom_call.1} parent=31 // pred_fallthru
          _
        // Predicated region
        $region37: #{tpu_custom_call.1} parent=31 // pred_check
          %p257 = pneg %p158
        $region38: #{tpu_custom_call.1} parent=31 // pred_check_branch
          %259 = sbr.rel (%p257) target = $region40
        $region39: #{tpu_custom_call.1} parent=31 // pred_region
          %p260 = scmp.lt.s32.totalorder %s23, 1
          %s261 = scalar_select %p260, %s23, 1
          %s262 = smul.addr %s261, 8
          %s263 = scalar_lea.vmem %s5, %s262
        $region40: #{tpu_custom_call.1} parent=31 // pred_fallthru
          _
        // Predicated region
        $region41: #{tpu_custom_call.1} parent=31 // pred_check
          %p264 = pneg %p184
        $region42: #{tpu_custom_call.1} parent=31 // pred_check_branch
          %266 = sbr.rel (%p264) target = $region44
        $region43: #{tpu_custom_call.1} parent=31 // pred_region
          %p267 = scmp.lt.s32.totalorder %s23, 1
          %s268 = scalar_select %p267, %s23, 1
          %s269 = smul.addr %s268, 3
          %s270 = smul.addr %s269, 2
          %s271 = scalar_lea.vmem %s6, %s270
        $region44: #{tpu_custom_call.1} parent=31 // pred_fallthru
          _
      $region32: #{tpu_custom_call.1} parent=5 // pred_fallthru
        _
      %p272 = scmp.le.s32.totalorder 1, %s16
      %p273 = scmp.lt.s32.totalorder %s16, 3
      %p274 = pnand %p272, %p273
      %p275 = pneg %p274
      // Predicated region
      $region45: #{tpu_custom_call.1} parent=5 // pred_check
        _
      $region46: #{tpu_custom_call.1} parent=5 // pred_check_branch
        %277 = sbr.rel (%p274) target = $region48
      $region47: #{tpu_custom_call.1} parent=5 // pred_region
        %s278 = ssub.s32 %s16, 1
        %p279 = pneg %p49
        %p280 = pneg %p46
        %p281 = pneg %p70
        %p282 = pneg %p67
        %p283 = pneg %p91
        %p284 = pneg %p88
        %p285 = pneg %p112
        %p286 = pneg %p109
        %p287 = scmp.lt.s32.totalorder %s25, 1
        %s288 = scalar_select %p287, %s25, 1
        %s289 = smul.addr %s288, 9
        %s290 = smul.addr %s289, 4
        %s291 = scalar_lea.vmem %s4, %s290
        %p292 = pneg %p138
        %p293 = pneg %p135
        %p294 = scmp.lt.s32.totalorder %s25, 1
        %s295 = scalar_select %p294, %s25, 1
        %s296 = smul.addr %s295, 8
        %s297 = scalar_lea.vmem %s5, %s296
        %p298 = pneg %p164
        %p299 = pneg %p161
        %p300 = scmp.lt.s32.totalorder %s25, 1
        %s301 = scalar_select %p300, %s25, 1
        %s302 = smul.addr %s301, 3
        %s303 = smul.addr %s302, 2
        %s304 = scalar_lea.vmem %s6, %s303
        %p305 = pneg %p190
        %p306 = pneg %p187
        %p307 = pneg %p218
        %p308 = pneg %p215
        %s309 = sand.u32 %s205, 1
        %s310 = scalar_lea.sflag [#allocation6], %s309
        %s311 = sand.u32 %s205, 1
        %s312 = smul.addr %s311, 16
        %s313 = scalar_lea.vmem [#allocation5], %s312
        %p314 = scmp.lt.s32.totalorder %s25, 1
        %s315 = scalar_select %p314, %s25, 1
        %s316 = smul.addr %s315, 9
        %s317 = smul.addr %s316, 4
        %s318 = scalar_lea.vmem %s4, %s317
        %p319 = scmp.lt.s32.totalorder %s25, 1
        %s320 = scalar_select %p319, %s25, 1
        %s321 = smul.addr %s320, 8
        %s322 = scalar_lea.vmem %s5, %s321
        %p323 = scmp.lt.s32.totalorder %s25, 1
        %s324 = scalar_select %p323, %s25, 1
        %s325 = smul.addr %s324, 3
        %s326 = smul.addr %s325, 2
        %s327 = scalar_lea.vmem %s6, %s326
        %s328 = smul.u32 2, %s26
        %p330 = scmp.eq.s32.totalorder %s26, 0
        // Predicated region
        $region49: #{tpu_custom_call.1} parent=47 // pred_check
          %p331 = pneg %p330
        $region50: #{tpu_custom_call.1} parent=47 // pred_check_branch
          %333 = sbr.rel (%p331) target = $region52
        $region51: #{tpu_custom_call.1} parent=47 // pred_region
          %v334 = vld [vmem:[%s0] sm:$0xff]
          %v335 = vld [vmem:[%s0 + $0x8] sm:$0xff]
          %v336 = vld [vmem:[%s0 + $0x10] sm:$0xff]
          %v337 = vld [vmem:[%s0 + $0x18] sm:$0xff]
          %v338 = vld [vmem:[%s0 + $0x20] sm:$0xff]
          %v339 = vld [vmem:[%s0 + $0x28] sm:$0xff]
          %v340 = vld [vmem:[%s0 + $0x30] sm:$0xff]
          %v341 = vld [vmem:[%s0 + $0x38] sm:$0xff]
          %v342 = vld [vmem:[%s0 + $0x40] sm:$0xff]
          %v343 = vld [vmem:[%s318] sm:$0xf]
          %v344 = vld [vmem:[%s318 + $0x4] sm:$0xf]
          %v345 = vld [vmem:[%s318 + $0x8] sm:$0xf]
          %v346 = vld [vmem:[%s318 + $0xc] sm:$0xf]
          %v347 = vld [vmem:[%s318 + $0x10] sm:$0xf]
          %v348 = vld [vmem:[%s318 + $0x14] sm:$0xf]
          %v349 = vld [vmem:[%s318 + $0x18] sm:$0xf]
          %v350 = vld [vmem:[%s318 + $0x1c] sm:$0xf]
          %v351 = vld [vmem:[%s318 + $0x20] sm:$0xf]
          %v352 = vunpack.c.l.bf16 %v343
          %v353 = vunpack.c.l.bf16 %v344
          %v354 = vunpack.c.l.bf16 %v345
          %v355 = vunpack.c.l.bf16 %v346
          %v356 = vunpack.c.l.bf16 %v347
          %v357 = vunpack.c.l.bf16 %v348
          %v358 = vunpack.c.l.bf16 %v349
          %v359 = vunpack.c.l.bf16 %v350
          %v360 = vunpack.c.l.bf16 %v351
          %v361 = vld [vmem:[%s1] sm:$0xff]
          %v362 = vld [vmem:[%s1 + $0x8] sm:$0xff]
          %v363 = vld [vmem:[%s1 + $0x10] sm:$0xff]
          %v364 = vld [vmem:[%s1 + $0x18] sm:$0xff]
          %v365 = vld [vmem:[%s1 + $0x20] sm:$0xff]
          %v366 = vld [vmem:[%s1 + $0x28] sm:$0xff]
          %v367 = vld [vmem:[%s1 + $0x30] sm:$0xff]
          %v368 = vld [vmem:[%s1 + $0x38] sm:$0xff]
          %v369 = vld [vmem:[%s1 + $0x40] sm:$0xff]
          %v370 = vmul.f32 %v352, %v361
          %v371 = vmul.f32 %v353, %v362
          %v372 = vmul.f32 %v354, %v363
          %v373 = vmul.f32 %v355, %v364
          %v374 = vmul.f32 %v356, %v365
          %v375 = vmul.f32 %v357, %v366
          %v376 = vmul.f32 %v358, %v367
          %v377 = vmul.f32 %v359, %v368
          %v378 = vmul.f32 %v360, %v369
          %v379 = vadd.f32 %v334, %v370
          %v380 = vadd.f32 %v335, %v371
          %v381 = vadd.f32 %v336, %v372
          %v382 = vadd.f32 %v337, %v373
          %v383 = vadd.f32 %v338, %v374
          %v384 = vadd.f32 %v339, %v375
          %v385 = vadd.f32 %v340, %v376
          %v386 = vadd.f32 %v341, %v377
          %v387 = vadd.f32 %v342, %v378
          %v388 = vpack.c.bf16 %v379, %v379
          %v389 = vpack.c.bf16 %v380, %v380
          %v390 = vpack.c.bf16 %v381, %v381
          %v391 = vpack.c.bf16 %v382, %v382
          %v392 = vpack.c.bf16 %v383, %v383
          %v393 = vpack.c.bf16 %v384, %v384
          %v394 = vpack.c.bf16 %v385, %v385
          %v395 = vpack.c.bf16 %v386, %v386
          %v396 = vpack.c.bf16 %v387, %v387
          %vm397 = vcmask 27648
          %398 = vst.msk [vmem:[#allocation2] sm:$0xf] %vm397, %v388
          %399 = vst.msk [vmem:[#allocation2 + $0x4] sm:$0xf] %vm397, %v389
          %400 = vst.msk [vmem:[#allocation2 + $0x8] sm:$0xf] %vm397, %v390
          %401 = vst.msk [vmem:[#allocation2 + $0xc] sm:$0xf] %vm397, %v391
          %402 = vst.msk [vmem:[#allocation2 + $0x10] sm:$0xf] %vm397, %v392
          %403 = vst.msk [vmem:[#allocation2 + $0x14] sm:$0xf] %vm397, %v393
          %404 = vst.msk [vmem:[#allocation2 + $0x18] sm:$0xf] %vm397, %v394
          %405 = vst.msk [vmem:[#allocation2 + $0x1c] sm:$0xf] %vm397, %v395
          %406 = vst.msk [vmem:[#allocation2 + $0x20] sm:$0xf] %vm397, %v396
          %v407 = vld [vmem:[%s2] sm:$0xff]
          %v408 = vld [vmem:[%s322] sm:$0xff]
          %v409 = vld [vmem:[%s3] sm:$0xff]
          %v410 = vmul.f32 %v408, %v409
          %v411 = vadd.f32 %v407, %v410
          %vm412 = vcmask 7168
          %413 = vst.msk [vmem:[#allocation3] sm:$0xff] %vm412, %v411
        $region52: #{tpu_custom_call.1} parent=47 // pred_fallthru
          _
        %v414 = vld [vmem:[%s327] sm:$0x3f]
        %415 = vst [vmem:[#allocation4] sm:$0xff] 0.0
        %416 = vst [vmem:[#allocation4 + $0x8] sm:$0xff] 0.0
        %v417 = vld [vmem:[#allocation4] sm:$0xff]
        %v418 = vld [vmem:[#allocation4 + $0x8] sm:$0xff]
        %v419 = vld [vmem:[#allocation2] sm:$0xf]
        %v422 = vunpack.c.l.s4 1983009808
        %v423 = vunpack.c.0.s8 %v422
        %v424 = vlaneseq
        %v425 = vshrl.u32 %v424, 7
        %v426 = vsub.s32 %v423, %v425
        %v427 = vrot.slane %v414, %v426
        %v428 = vcombine.high %v427, %v427
        %vm429 = vcmask 31744
        %v431 = vsel %vm429, %v419, 0
        %vm433 = vcmask 1041408
        %v435 = vsel %vm433, %v427, 0
        %v438 = vsel %vm433, %v428, 0
        %440 = vmatprep.subr.bf16.mxu0 0
        %441 = vmatpush1.bf16.msra.mxu0 0
        %442 = vmatprep.subr.bf16.mxu0 0
        %443 = vmatpush1.bf16.msra.mxu0 0
        %444 = vmatprep.subr.bf16.mxu0 0
        %445 = vmatpush1.bf16.msra.mxu0 0
        %446 = vmatprep.subr.bf16.mxu0 0
        %447 = vmatpush1.bf16.msra.mxu0 0
        %448 = vmatprep.subr.bf16.mxu0 0
        %449 = vmatpush1.bf16.msra.mxu0 0
        %450 = vmatprep.subr.bf16.mxu0 0
        %451 = vmatpush1.bf16.msra.mxu0 0
        %452 = vmatprep.subr.bf16.mxu0 0
        %453 = vmatpush1.bf16.msra.mxu0 0
        %454 = vmatprep.subr.bf16.mxu0 %v438
        %455 = vmatpush1.bf16.msra.mxu0 %v435
        %456 = vmatprep.subr.bf16.mxu0 0
        %457 = vmatpush2.bf16.msra.mxu0 0
        %458 = vmatprep.subr.bf16.mxu0 0
        %459 = vmatpush2.bf16.msra.mxu0 0
        %460 = vmatprep.subr.bf16.mxu0 0
        %461 = vmatpush2.bf16.msra.mxu0 0
        %462 = vmatprep.subr.bf16.mxu0 0
        %463 = vmatpush2.bf16.msra.mxu0 0
        %464 = vmatprep.subr.bf16.mxu0 0
        %465 = vmatpush2.bf16.msra.mxu0 0
        %466 = vmatprep.subr.bf16.mxu0 0
        %467 = vmatpush2.bf16.msra.mxu0 0
        %468 = vmatprep.subr.bf16.mxu0 0
        %469 = vmatpush2.bf16.msra.mxu0 0
        %470 = vmatprep.subr.bf16.mxu0 0
        %471 = vmatpush2.bf16.msra.mxu0 0
        %472 = vmatprep.mubr.bf16.mxu0 0
        %473 = vmatmul.mubr.bf16.gmra.mxu0 %v431
        %v474 = vpop.f32.mrf.mxu0
        %v475 = vadd.f32 0.0, %v474
        %v476 = vpop.f32.mrf.mxu0
        %v477 = vadd.f32 0.0, %v476
        %v478 = vpop.f32.mrf.mxu0
        %v479 = vpop.f32.mrf.mxu0
        %480 = vdwg.mxu0
        %v481 = vadd.f32 %v417, %v475
        %v482 = vadd.f32 %v418, %v477
        %483 = vst [vmem:[#allocation4] sm:$0xff] %v481
        %484 = vst [vmem:[#allocation4 + $0x8] sm:$0xff] %v482
        %v485 = vld [vmem:[#allocation4] sm:$0xff]
        %v486 = vld [vmem:[#allocation4 + $0x8] sm:$0xff]
        %s487 = scalar_lea.vmem [#allocation2], 4
        %v488 = vld [vmem:[%s487] sm:$0xf]
        %v489 = vcombine.high %v414, %v414
        %v491 = vunpack.c.l.s4 1983009808
        %v492 = vunpack.c.0.s8 %v491
        %v493 = vlaneseq
        %v494 = vshrl.u32 %v493, 7
        %v495 = vsub.s32 %v492, %v494
        %v496 = vrot.slane %v489, %v495
        %497 = vrot.lane.b32.xlu0 %v427, 127
        %v498 = vpop.permute.xlu0 %497
        %499 = vrot.lane.b32.xlu0 %v428, 127
        %v500 = vpop.permute.xlu0 %499
        %501 = vrot.lane.b32.xlu0 %v496, 127
        %v502 = vpop.permute.xlu0 %501
        %vm503 = vcmask 1039360
        %v504 = vsel %vm503, %v498, %v500
        %v505 = vsel %vm503, %v500, %v502
        %v507 = vsel %vm429, %v488, 0
        %v510 = vsel %vm433, %v504, 0
        %v513 = vsel %vm433, %v505, 0
        %515 = vmatprep.subr.bf16.mxu0 0
        %516 = vmatpush1.bf16.msra.mxu0 0
        %517 = vmatprep.subr.bf16.mxu0 0
        %518 = vmatpush1.bf16.msra.mxu0 0
        %519 = vmatprep.subr.bf16.mxu0 0
        %520 = vmatpush1.bf16.msra.mxu0 0
        %521 = vmatprep.subr.bf16.mxu0 0
        %522 = vmatpush1.bf16.msra.mxu0 0
        %523 = vmatprep.subr.bf16.mxu0 0
        %524 = vmatpush1.bf16.msra.mxu0 0
        %525 = vmatprep.subr.bf16.mxu0 0
        %526 = vmatpush1.bf16.msra.mxu0 0
        %527 = vmatprep.subr.bf16.mxu0 0
        %528 = vmatpush1.bf16.msra.mxu0 0
        %529 = vmatprep.subr.bf16.mxu0 %v513
        %530 = vmatpush1.bf16.msra.mxu0 %v510
        %531 = vmatprep.subr.bf16.mxu0 0
        %532 = vmatpush2.bf16.msra.mxu0 0
        %533 = vmatprep.subr.bf16.mxu0 0
        %534 = vmatpush2.bf16.msra.mxu0 0
        %535 = vmatprep.subr.bf16.mxu0 0
        %536 = vmatpush2.bf16.msra.mxu0 0
        %537 = vmatprep.subr.bf16.mxu0 0
        %538 = vmatpush2.bf16.msra.mxu0 0
        %539 = vmatprep.subr.bf16.mxu0 0
        %540 = vmatpush2.bf16.msra.mxu0 0
        %541 = vmatprep.subr.bf16.mxu0 0
        %542 = vmatpush2.bf16.msra.mxu0 0
        %543 = vmatprep.subr.bf16.mxu0 0
        %544 = vmatpush2.bf16.msra.mxu0 0
        %545 = vmatprep.subr.bf16.mxu0 0
        %546 = vmatpush2.bf16.msra.mxu0 0
        %547 = vmatprep.mubr.bf16.mxu0 0
        %548 = vmatmul.mubr.bf16.gmra.mxu0 %v507
        %v549 = vpop.f32.mrf.mxu0
        %v550 = vadd.f32 0.0, %v549
        %v551 = vpop.f32.mrf.mxu0
        %v552 = vadd.f32 0.0, %v551
        %v553 = vpop.f32.mrf.mxu0
        %v554 = vpop.f32.mrf.mxu0
        %555 = vdwg.mxu0
        %v556 = vadd.f32 %v485, %v550
        %v557 = vadd.f32 %v486, %v552
        %558 = vst [vmem:[#allocation4] sm:$0xff] %v556
        %559 = vst [vmem:[#allocation4 + $0x8] sm:$0xff] %v557
        %v560 = vld [vmem:[#allocation4] sm:$0xff]
        %v561 = vld [vmem:[#allocation4 + $0x8] sm:$0xff]
        %s562 = scalar_lea.vmem [#allocation2], 8
        %v563 = vld [vmem:[%s562] sm:$0xf]
        %564 = vrot.lane.b32.xlu0 %v427, 126
        %v565 = vpop.permute.xlu0 %564
        %566 = vrot.lane.b32.xlu0 %v428, 126
        %v567 = vpop.permute.xlu0 %566
        %568 = vrot.lane.b32.xlu0 %v496, 126
        %v569 = vpop.permute.xlu0 %568
        %vm570 = vcmask 1031168
        %v571 = vsel %vm570, %v565, %v567
        %v572 = vsel %vm570, %v567, %v569
        %v574 = vsel %vm429, %v563, 0
        %v577 = vsel %vm433, %v571, 0
        %v580 = vsel %vm433, %v572, 0
        %582 = vmatprep.subr.bf16.mxu0 0
        %583 = vmatpush1.bf16.msra.mxu0 0
        %584 = vmatprep.subr.bf16.mxu0 0
        %585 = vmatpush1.bf16.msra.mxu0 0
        %586 = vmatprep.subr.bf16.mxu0 0
        %587 = vmatpush1.bf16.msra.mxu0 0
        %588 = vmatprep.subr.bf16.mxu0 0
        %589 = vmatpush1.bf16.msra.mxu0 0
        %590 = vmatprep.subr.bf16.mxu0 0
        %591 = vmatpush1.bf16.msra.mxu0 0
        %592 = vmatprep.subr.bf16.mxu0 0
        %593 = vmatpush1.bf16.msra.mxu0 0
        %594 = vmatprep.subr.bf16.mxu0 0
        %595 = vmatpush1.bf16.msra.mxu0 0
        %596 = vmatprep.subr.bf16.mxu0 %v580
        %597 = vmatpush1.bf16.msra.mxu0 %v577
        %598 = vmatprep.subr.bf16.mxu0 0
        %599 = vmatpush2.bf16.msra.mxu0 0
        %600 = vmatprep.subr.bf16.mxu0 0
        %601 = vmatpush2.bf16.msra.mxu0 0
        %602 = vmatprep.subr.bf16.mxu0 0
        %603 = vmatpush2.bf16.msra.mxu0 0
        %604 = vmatprep.subr.bf16.mxu0 0
        %605 = vmatpush2.bf16.msra.mxu0 0
        %606 = vmatprep.subr.bf16.mxu0 0
        %607 = vmatpush2.bf16.msra.mxu0 0
        %608 = vmatprep.subr.bf16.mxu0 0
        %609 = vmatpush2.bf16.msra.mxu0 0
        %610 = vmatprep.subr.bf16.mxu0 0
        %611 = vmatpush2.bf16.msra.mxu0 0
        %612 = vmatprep.subr.bf16.mxu0 0
        %613 = vmatpush2.bf16.msra.mxu0 0
        %614 = vmatprep.mubr.bf16.mxu0 0
        %615 = vmatmul.mubr.bf16.gmra.mxu0 %v574
        %v616 = vpop.f32.mrf.mxu0
        %v617 = vadd.f32 0.0, %v616
        %v618 = vpop.f32.mrf.mxu0
        %v619 = vadd.f32 0.0, %v618
        %v620 = vpop.f32.mrf.mxu0
        %v621 = vpop.f32.mrf.mxu0
        %622 = vdwg.mxu0
        %v623 = vadd.f32 %v560, %v617
        %v624 = vadd.f32 %v561, %v619
        %625 = vst [vmem:[#allocation4] sm:$0xff] %v623
        %626 = vst [vmem:[#allocation4 + $0x8] sm:$0xff] %v624
        %v627 = vld [vmem:[#allocation4] sm:$0xff]
        %v628 = vld [vmem:[#allocation4 + $0x8] sm:$0xff]
        %s629 = scalar_lea.vmem [#allocation2], 12
        %v630 = vld [vmem:[%s629] sm:$0xf]
        %631 = vrot.lane.b32.xlu0 %v427, 112
        %v632 = vpop.permute.xlu0 %631
        %633 = vrot.lane.b32.xlu0 %v428, 112
        %v634 = vpop.permute.xlu0 %633
        %635 = vrot.lane.b32.xlu0 %v496, 112
        %v636 = vpop.permute.xlu0 %635
        %vm637 = vcmask 916480
        %v638 = vsel %vm637, %v632, %v634
        %v639 = vsel %vm637, %v634, %v636
        %v641 = vsel %vm429, %v630, 0
        %v644 = vsel %vm433, %v638, 0
        %v647 = vsel %vm433, %v639, 0
        %649 = vmatprep.subr.bf16.mxu0 0
        %650 = vmatpush1.bf16.msra.mxu0 0
        %651 = vmatprep.subr.bf16.mxu0 0
        %652 = vmatpush1.bf16.msra.mxu0 0
        %653 = vmatprep.subr.bf16.mxu0 0
        %654 = vmatpush1.bf16.msra.mxu0 0
        %655 = vmatprep.subr.bf16.mxu0 0
        %656 = vmatpush1.bf16.msra.mxu0 0
        %657 = vmatprep.subr.bf16.mxu0 0
        %658 = vmatpush1.bf16.msra.mxu0 0
        %659 = vmatprep.subr.bf16.mxu0 0
        %660 = vmatpush1.bf16.msra.mxu0 0
        %661 = vmatprep.subr.bf16.mxu0 0
        %662 = vmatpush1.bf16.msra.mxu0 0
        %663 = vmatprep.subr.bf16.mxu0 %v647
        %664 = vmatpush1.bf16.msra.mxu0 %v644
        %665 = vmatprep.subr.bf16.mxu0 0
        %666 = vmatpush2.bf16.msra.mxu0 0
        %667 = vmatprep.subr.bf16.mxu0 0
        %668 = vmatpush2.bf16.msra.mxu0 0
        %669 = vmatprep.subr.bf16.mxu0 0
        %670 = vmatpush2.bf16.msra.mxu0 0
        %671 = vmatprep.subr.bf16.mxu0 0
        %672 = vmatpush2.bf16.msra.mxu0 0
        %673 = vmatprep.subr.bf16.mxu0 0
        %674 = vmatpush2.bf16.msra.mxu0 0
        %675 = vmatprep.subr.bf16.mxu0 0
        %676 = vmatpush2.bf16.msra.mxu0 0
        %677 = vmatprep.subr.bf16.mxu0 0
        %678 = vmatpush2.bf16.msra.mxu0 0
        %679 = vmatprep.subr.bf16.mxu0 0
        %680 = vmatpush2.bf16.msra.mxu0 0
        %681 = vmatprep.mubr.bf16.mxu0 0
        %682 = vmatmul.mubr.bf16.gmra.mxu0 %v641
        %v683 = vpop.f32.mrf.mxu0
        %v684 = vadd.f32 0.0, %v683
        %v685 = vpop.f32.mrf.mxu0
        %v686 = vadd.f32 0.0, %v685
        %v687 = vpop.f32.mrf.mxu0
        %v688 = vpop.f32.mrf.mxu0
        %689 = vdwg.mxu0
        %v690 = vadd.f32 %v627, %v684
        %v691 = vadd.f32 %v628, %v686
        %692 = vst [vmem:[#allocation4] sm:$0xff] %v690
        %693 = vst [vmem:[#allocation4 + $0x8] sm:$0xff] %v691
        %v694 = vld [vmem:[#allocation4] sm:$0xff]
        %v695 = vld [vmem:[#allocation4 + $0x8] sm:$0xff]
        %s696 = scalar_lea.vmem [#allocation2], 16
        %v697 = vld [vmem:[%s696] sm:$0xf]
        %698 = vrot.lane.b32.xlu0 %v427, 111
        %v699 = vpop.permute.xlu0 %698
        %700 = vrot.lane.b32.xlu0 %v428, 111
        %v701 = vpop.permute.xlu0 %700
        %702 = vrot.lane.b32.xlu0 %v496, 111
        %v703 = vpop.permute.xlu0 %702
        %vm704 = vcmask 908288
        %v705 = vsel %vm704, %v699, %v701
        %v706 = vsel %vm704, %v701, %v703
        %v708 = vsel %vm429, %v697, 0
        %v711 = vsel %vm433, %v705, 0
        %v714 = vsel %vm433, %v706, 0
        %716 = vmatprep.subr.bf16.mxu0 0
        %717 = vmatpush1.bf16.msra.mxu0 0
        %718 = vmatprep.subr.bf16.mxu0 0
        %719 = vmatpush1.bf16.msra.mxu0 0
        %720 = vmatprep.subr.bf16.mxu0 0
        %721 = vmatpush1.bf16.msra.mxu0 0
        %722 = vmatprep.subr.bf16.mxu0 0
        %723 = vmatpush1.bf16.msra.mxu0 0
        %724 = vmatprep.subr.bf16.mxu0 0
        %725 = vmatpush1.bf16.msra.mxu0 0
        %726 = vmatprep.subr.bf16.mxu0 0
        %727 = vmatpush1.bf16.msra.mxu0 0
        %728 = vmatprep.subr.bf16.mxu0 0
        %729 = vmatpush1.bf16.msra.mxu0 0
        %730 = vmatprep.subr.bf16.mxu0 %v714
        %731 = vmatpush1.bf16.msra.mxu0 %v711
        %732 = vmatprep.subr.bf16.mxu0 0
        %733 = vmatpush2.bf16.msra.mxu0 0
        %734 = vmatprep.subr.bf16.mxu0 0
        %735 = vmatpush2.bf16.msra.mxu0 0
        %736 = vmatprep.subr.bf16.mxu0 0
        %737 = vmatpush2.bf16.msra.mxu0 0
        %738 = vmatprep.subr.bf16.mxu0 0
        %739 = vmatpush2.bf16.msra.mxu0 0
        %740 = vmatprep.subr.bf16.mxu0 0
        %741 = vmatpush2.bf16.msra.mxu0 0
        %742 = vmatprep.subr.bf16.mxu0 0
        %743 = vmatpush2.bf16.msra.mxu0 0
        %744 = vmatprep.subr.bf16.mxu0 0
        %745 = vmatpush2.bf16.msra.mxu0 0
        %746 = vmatprep.subr.bf16.mxu0 0
        %747 = vmatpush2.bf16.msra.mxu0 0
        %748 = vmatprep.mubr.bf16.mxu0 0
        %749 = vmatmul.mubr.bf16.gmra.mxu0 %v708
        %v750 = vpop.f32.mrf.mxu0
        %v751 = vadd.f32 0.0, %v750
        %v752 = vpop.f32.mrf.mxu0
        %v753 = vadd.f32 0.0, %v752
        %v754 = vpop.f32.mrf.mxu0
        %v755 = vpop.f32.mrf.mxu0
        %756 = vdwg.mxu0
        %v757 = vadd.f32 %v694, %v751
        %v758 = vadd.f32 %v695, %v753
        %759 = vst [vmem:[#allocation4] sm:$0xff] %v757
        %760 = vst [vmem:[#allocation4 + $0x8] sm:$0xff] %v758
        %v761 = vld [vmem:[#allocation4] sm:$0xff]
        %v762 = vld [vmem:[#allocation4 + $0x8] sm:$0xff]
        %s763 = scalar_lea.vmem [#allocation2], 20
        %v764 = vld [vmem:[%s763] sm:$0xf]
        %765 = vrot.lane.b32.xlu0 %v427, 110
        %v766 = vpop.permute.xlu0 %765
        %767 = vrot.lane.b32.xlu0 %v428, 110
        %v768 = vpop.permute.xlu0 %767
        %769 = vrot.lane.b32.xlu0 %v496, 110
        %v770 = vpop.permute.xlu0 %769
        %vm771 = vcmask 900096
        %v772 = vsel %vm771, %v766, %v768
        %v773 = vsel %vm771, %v768, %v770
        %v775 = vsel %vm429, %v764, 0
        %v778 = vsel %vm433, %v772, 0
        %v781 = vsel %vm433, %v773, 0
        %783 = vmatprep.subr.bf16.mxu0 0
        %784 = vmatpush1.bf16.msra.mxu0 0
        %785 = vmatprep.subr.bf16.mxu0 0
        %786 = vmatpush1.bf16.msra.mxu0 0
        %787 = vmatprep.subr.bf16.mxu0 0
        %788 = vmatpush1.bf16.msra.mxu0 0
        %789 = vmatprep.subr.bf16.mxu0 0
        %790 = vmatpush1.bf16.msra.mxu0 0
        %791 = vmatprep.subr.bf16.mxu0 0
        %792 = vmatpush1.bf16.msra.mxu0 0
        %793 = vmatprep.subr.bf16.mxu0 0
        %794 = vmatpush1.bf16.msra.mxu0 0
        %795 = vmatprep.subr.bf16.mxu0 0
        %796 = vmatpush1.bf16.msra.mxu0 0
        %797 = vmatprep.subr.bf16.mxu0 %v781
        %798 = vmatpush1.bf16.msra.mxu0 %v778
        %799 = vmatprep.subr.bf16.mxu0 0
        %800 = vmatpush2.bf16.msra.mxu0 0
        %801 = vmatprep.subr.bf16.mxu0 0
        %802 = vmatpush2.bf16.msra.mxu0 0
        %803 = vmatprep.subr.bf16.mxu0 0
        %804 = vmatpush2.bf16.msra.mxu0 0
        %805 = vmatprep.subr.bf16.mxu0 0
        %806 = vmatpush2.bf16.msra.mxu0 0
        %807 = vmatprep.subr.bf16.mxu0 0
        %808 = vmatpush2.bf16.msra.mxu0 0
        %809 = vmatprep.subr.bf16.mxu0 0
        %810 = vmatpush2.bf16.msra.mxu0 0
        %811 = vmatprep.subr.bf16.mxu0 0
        %812 = vmatpush2.bf16.msra.mxu0 0
        %813 = vmatprep.subr.bf16.mxu0 0
        %814 = vmatpush2.bf16.msra.mxu0 0
        %815 = vmatprep.mubr.bf16.mxu0 0
        %816 = vmatmul.mubr.bf16.gmra.mxu0 %v775
        %v817 = vpop.f32.mrf.mxu0
        %v818 = vadd.f32 0.0, %v817
        %v819 = vpop.f32.mrf.mxu0
        %v820 = vadd.f32 0.0, %v819
        %v821 = vpop.f32.mrf.mxu0
        %v822 = vpop.f32.mrf.mxu0
        %823 = vdwg.mxu0
        %v824 = vadd.f32 %v761, %v818
        %v825 = vadd.f32 %v762, %v820
        %826 = vst [vmem:[#allocation4] sm:$0xff] %v824
        %827 = vst [vmem:[#allocation4 + $0x8] sm:$0xff] %v825
        %v828 = vld [vmem:[#allocation4] sm:$0xff]
        %v829 = vld [vmem:[#allocation4 + $0x8] sm:$0xff]
        %s830 = scalar_lea.vmem [#allocation2], 24
        %v831 = vld [vmem:[%s830] sm:$0xf]
        %832 = vrot.lane.b32.xlu0 %v427, 96
        %v833 = vpop.permute.xlu0 %832
        %834 = vrot.lane.b32.xlu0 %v428, 96
        %v835 = vpop.permute.xlu0 %834
        %836 = vrot.lane.b32.xlu0 %v496, 96
        %v837 = vpop.permute.xlu0 %836
        %vm838 = vcmask 785408
        %v839 = vsel %vm838, %v833, %v835
        %v840 = vsel %vm838, %v835, %v837
        %v842 = vsel %vm429, %v831, 0
        %v845 = vsel %vm433, %v839, 0
        %v848 = vsel %vm433, %v840, 0
        %850 = vmatprep.subr.bf16.mxu0 0
        %851 = vmatpush1.bf16.msra.mxu0 0
        %852 = vmatprep.subr.bf16.mxu0 0
        %853 = vmatpush1.bf16.msra.mxu0 0
        %854 = vmatprep.subr.bf16.mxu0 0
        %855 = vmatpush1.bf16.msra.mxu0 0
        %856 = vmatprep.subr.bf16.mxu0 0
        %857 = vmatpush1.bf16.msra.mxu0 0
        %858 = vmatprep.subr.bf16.mxu0 0
        %859 = vmatpush1.bf16.msra.mxu0 0
        %860 = vmatprep.subr.bf16.mxu0 0
        %861 = vmatpush1.bf16.msra.mxu0 0
        %862 = vmatprep.subr.bf16.mxu0 0
        %863 = vmatpush1.bf16.msra.mxu0 0
        %864 = vmatprep.subr.bf16.mxu0 %v848
        %865 = vmatpush1.bf16.msra.mxu0 %v845
        %866 = vmatprep.subr.bf16.mxu0 0
        %867 = vmatpush2.bf16.msra.mxu0 0
        %868 = vmatprep.subr.bf16.mxu0 0
        %869 = vmatpush2.bf16.msra.mxu0 0
        %870 = vmatprep.subr.bf16.mxu0 0
        %871 = vmatpush2.bf16.msra.mxu0 0
        %872 = vmatprep.subr.bf16.mxu0 0
        %873 = vmatpush2.bf16.msra.mxu0 0
        %874 = vmatprep.subr.bf16.mxu0 0
        %875 = vmatpush2.bf16.msra.mxu0 0
        %876 = vmatprep.subr.bf16.mxu0 0
        %877 = vmatpush2.bf16.msra.mxu0 0
        %878 = vmatprep.subr.bf16.mxu0 0
        %879 = vmatpush2.bf16.msra.mxu0 0
        %880 = vmatprep.subr.bf16.mxu0 0
        %881 = vmatpush2.bf16.msra.mxu0 0
        %882 = vmatprep.mubr.bf16.mxu0 0
        %883 = vmatmul.mubr.bf16.gmra.mxu0 %v842
        %v884 = vpop.f32.mrf.mxu0
        %v885 = vadd.f32 0.0, %v884
        %v886 = vpop.f32.mrf.mxu0
        %v887 = vadd.f32 0.0, %v886
        %v888 = vpop.f32.mrf.mxu0
        %v889 = vpop.f32.mrf.mxu0
        %890 = vdwg.mxu0
        %v891 = vadd.f32 %v828, %v885
        %v892 = vadd.f32 %v829, %v887
        %893 = vst [vmem:[#allocation4] sm:$0xff] %v891
        %894 = vst [vmem:[#allocation4 + $0x8] sm:$0xff] %v892
        %v895 = vld [vmem:[#allocation4] sm:$0xff]
        %v896 = vld [vmem:[#allocation4 + $0x8] sm:$0xff]
        %s897 = scalar_lea.vmem [#allocation2], 28
        %v898 = vld [vmem:[%s897] sm:$0xf]
        %899 = vrot.lane.b32.xlu0 %v427, 95
        %v900 = vpop.permute.xlu0 %899
        %901 = vrot.lane.b32.xlu0 %v428, 95
        %v902 = vpop.permute.xlu0 %901
        %903 = vrot.lane.b32.xlu0 %v496, 95
        %v904 = vpop.permute.xlu0 %903
        %vm905 = vcmask 777216
        %v906 = vsel %vm905, %v900, %v902
        %v907 = vsel %vm905, %v902, %v904
        %v909 = vsel %vm429, %v898, 0
        %v912 = vsel %vm433, %v906, 0
        %v915 = vsel %vm433, %v907, 0
        %917 = vmatprep.subr.bf16.mxu0 0
        %918 = vmatpush1.bf16.msra.mxu0 0
        %919 = vmatprep.subr.bf16.mxu0 0
        %920 = vmatpush1.bf16.msra.mxu0 0
        %921 = vmatprep.subr.bf16.mxu0 0
        %922 = vmatpush1.bf16.msra.mxu0 0
        %923 = vmatprep.subr.bf16.mxu0 0
        %924 = vmatpush1.bf16.msra.mxu0 0
        %925 = vmatprep.subr.bf16.mxu0 0
        %926 = vmatpush1.bf16.msra.mxu0 0
        %927 = vmatprep.subr.bf16.mxu0 0
        %928 = vmatpush1.bf16.msra.mxu0 0
        %929 = vmatprep.subr.bf16.mxu0 0
        %930 = vmatpush1.bf16.msra.mxu0 0
        %931 = vmatprep.subr.bf16.mxu0 %v915
        %932 = vmatpush1.bf16.msra.mxu0 %v912
        %933 = vmatprep.subr.bf16.mxu0 0
        %934 = vmatpush2.bf16.msra.mxu0 0
        %935 = vmatprep.subr.bf16.mxu0 0
        %936 = vmatpush2.bf16.msra.mxu0 0
        %937 = vmatprep.subr.bf16.mxu0 0
        %938 = vmatpush2.bf16.msra.mxu0 0
        %939 = vmatprep.subr.bf16.mxu0 0
        %940 = vmatpush2.bf16.msra.mxu0 0
        %941 = vmatprep.subr.bf16.mxu0 0
        %942 = vmatpush2.bf16.msra.mxu0 0
        %943 = vmatprep.subr.bf16.mxu0 0
        %944 = vmatpush2.bf16.msra.mxu0 0
        %945 = vmatprep.subr.bf16.mxu0 0
        %946 = vmatpush2.bf16.msra.mxu0 0
        %947 = vmatprep.subr.bf16.mxu0 0
        %948 = vmatpush2.bf16.msra.mxu0 0
        %949 = vmatprep.mubr.bf16.mxu0 0
        %950 = vmatmul.mubr.bf16.gmra.mxu0 %v909
        %v951 = vpop.f32.mrf.mxu0
        %v952 = vadd.f32 0.0, %v951
        %v953 = vpop.f32.mrf.mxu0
        %v954 = vadd.f32 0.0, %v953
        %v955 = vpop.f32.mrf.mxu0
        %v956 = vpop.f32.mrf.mxu0
        %957 = vdwg.mxu0
        %v958 = vadd.f32 %v895, %v952
        %v959 = vadd.f32 %v896, %v954
        %960 = vst [vmem:[#allocation4] sm:$0xff] %v958
        %961 = vst [vmem:[#allocation4 + $0x8] sm:$0xff] %v959
        %v962 = vld [vmem:[#allocation4] sm:$0xff]
        %v963 = vld [vmem:[#allocation4 + $0x8] sm:$0xff]
        %s964 = scalar_lea.vmem [#allocation2], 32
        %v965 = vld [vmem:[%s964] sm:$0xf]
        %966 = vrot.lane.b32.xlu0 %v427, 94
        %v967 = vpop.permute.xlu0 %966
        %968 = vrot.lane.b32.xlu0 %v428, 94
        %v969 = vpop.permute.xlu0 %968
        %970 = vrot.lane.b32.xlu0 %v496, 94
        %v971 = vpop.permute.xlu0 %970
        %vm972 = vcmask 769024
        %v973 = vsel %vm972, %v967, %v969
        %v974 = vsel %vm972, %v969, %v971
        %v976 = vsel %vm429, %v965, 0
        %v979 = vsel %vm433, %v973, 0
        %v982 = vsel %vm433, %v974, 0
        %984 = vmatprep.subr.bf16.mxu0 0
        %985 = vmatpush1.bf16.msra.mxu0 0
        %986 = vmatprep.subr.bf16.mxu0 0
        %987 = vmatpush1.bf16.msra.mxu0 0
        %988 = vmatprep.subr.bf16.mxu0 0
        %989 = vmatpush1.bf16.msra.mxu0 0
        %990 = vmatprep.subr.bf16.mxu0 0
        %991 = vmatpush1.bf16.msra.mxu0 0
        %992 = vmatprep.subr.bf16.mxu0 0
        %993 = vmatpush1.bf16.msra.mxu0 0
        %994 = vmatprep.subr.bf16.mxu0 0
        %995 = vmatpush1.bf16.msra.mxu0 0
        %996 = vmatprep.subr.bf16.mxu0 0
        %997 = vmatpush1.bf16.msra.mxu0 0
        %998 = vmatprep.subr.bf16.mxu0 %v982
        %999 = vmatpush1.bf16.msra.mxu0 %v979
        %1000 = vmatprep.subr.bf16.mxu0 0
        %1001 = vmatpush2.bf16.msra.mxu0 0
        %1002 = vmatprep.subr.bf16.mxu0 0
        %1003 = vmatpush2.bf16.msra.mxu0 0
        %1004 = vmatprep.subr.bf16.mxu0 0
        %1005 = vmatpush2.bf16.msra.mxu0 0
        %1006 = vmatprep.subr.bf16.mxu0 0
        %1007 = vmatpush2.bf16.msra.mxu0 0
        %1008 = vmatprep.subr.bf16.mxu0 0
        %1009 = vmatpush2.bf16.msra.mxu0 0
        %1010 = vmatprep.subr.bf16.mxu0 0
        %1011 = vmatpush2.bf16.msra.mxu0 0
        %1012 = vmatprep.subr.bf16.mxu0 0
        %1013 = vmatpush2.bf16.msra.mxu0 0
        %1014 = vmatprep.subr.bf16.mxu0 0
        %1015 = vmatpush2.bf16.msra.mxu0 0
        %1016 = vmatprep.mubr.bf16.mxu0 0
        %1017 = vmatmul.mubr.bf16.gmra.mxu0 %v976
        %v1018 = vpop.f32.mrf.mxu0
        %v1019 = vadd.f32 0.0, %v1018
        %v1020 = vpop.f32.mrf.mxu0
        %v1021 = vadd.f32 0.0, %v1020
        %v1022 = vpop.f32.mrf.mxu0
        %v1023 = vpop.f32.mrf.mxu0
        %1024 = vdwg.mxu0
        %v1025 = vadd.f32 %v962, %v1019
        %v1026 = vadd.f32 %v963, %v1021
        %1027 = vst [vmem:[#allocation4] sm:$0xff] %v1025
        %1028 = vst [vmem:[#allocation4 + $0x8] sm:$0xff] %v1026
        %v1029 = vld [vmem:[#allocation4] sm:$0xff]
        %v1030 = vld [vmem:[#allocation4 + $0x8] sm:$0xff]
        %v1031 = vld [vmem:[#allocation3] sm:$0xff]
        %1033 = vset.pattern.permute.xlu0 0
        %1034 = vperm.xlu0 %1033, %v1031
        %v1035 = vpop.permute.xlu0 %1034
        %v1037 = vadd.f32 %v1029, %v1035
        %v1038 = vadd.f32 %v1030, %v1035
        %1039 = vst [vmem:[%s313] sm:$0xff] %v1037
        %1040 = vst [vmem:[%s313 + $0x8] sm:$0xff] %v1038
        %s1041 = sand.u32 %s205, 1
        %s1042 = scalar_lea.sflag [#allocation6], %s1041
        %s1043 = sand.u32 %s205, 1
        %s1044 = smul.addr %s1043, 16
        %s1045 = scalar_lea.vmem [#allocation5], %s1044
        // Predicated region
        $region53: #{tpu_custom_call.1} parent=47 // pred_check
          %p1046 = pneg %p215
        $region54: #{tpu_custom_call.1} parent=47 // pred_check_branch
          %1048 = sbr.rel (%p1046) target = $region56
        $region55: #{tpu_custom_call.1} parent=47 // pred_region
          %s1049 = smul.u32 2, %s26
          %s1051 = ssub.s32 256, 256
          %1052 = vsyncadd %s1042, %s1051
          %s1053 = smul.addr %s25, 2
          %s1054 = sadd.s32 %s1049, %s1053
          %s1055 = smul.addr %s1054, 128
          %s1056 = scalar_lea.hbm %s7, %s1055
          %s1058 = sshll.u32 %s1045, 4
          %s1059 = int_to_ptr.vmem [resolvable:$true] %s1058
          %1061 = dma.vmem_to_hbm [thread:$0]  %s1059, 256, %s1056, %s1042
        $region56: #{tpu_custom_call.1} parent=47 // pred_fallthru
          _
      $region48: #{tpu_custom_call.1} parent=5 // pred_fallthru
        _
      %p1062 = scmp.le.s32.totalorder 2, %s16
      // Predicated region
      $region57: #{tpu_custom_call.1} parent=5 // pred_check
        %p1063 = pneg %p1062
      $region58: #{tpu_custom_call.1} parent=5 // pred_check_branch
        %1065 = sbr.rel (%p1063) target = $region60
      $region59: #{tpu_custom_call.1} parent=5 // pred_region
        %s1066 = ssub.s32 %s16, 2
        // Predicated region
        $region61: #{tpu_custom_call.1} parent=59 // pred_check
          %p1067 = pneg %p221
        $region62: #{tpu_custom_call.1} parent=59 // pred_check_branch
          %1069 = sbr.rel (%p1067) target = $region64
        $region63: #{tpu_custom_call.1} parent=59 // pred_region
          %s1070 = sand.u32 %s206, 1
          %s1071 = scalar_lea.sflag [#allocation6], %s1070
          %s1072 = sand.u32 %s206, 1
          %s1073 = smul.addr %s1072, 16
          %s1074 = scalar_lea.vmem [#allocation5], %s1073
          %1075 = dma.done %s1071, 256
        $region64: #{tpu_custom_call.1} parent=59 // pred_fallthru
          _
      $region60: #{tpu_custom_call.1} parent=5 // pred_fallthru
        _
    $region6: #{tpu_custom_call.1} parent=1 // loop_footer
      %s20 = sadd.s32 1, %s16
    $region7: #{tpu_custom_call.1} parent=1 // loop_footer_branch
      %15 = sbr.rel target = $region3
    $region8: #{tpu_custom_call.1} parent=1 // loop_exit
      _
    %1076 = vsyncpa [#allocation6], 1
    %s1077 = scalar_lea.sflag [#allocation6], 1
    %1078 = vsyncpa %s1077, 1

// kernel: tpu_custom_call.1
$region0: #{tpu_custom_call.1}
  #allocation0 [shape = 'u32[]', space=smem, size = 0x4, offset = 0x4, fixed_abs, tag = 'smem constant byte address 0x4 - core index']
  #allocation1 [shape = 'u32[144,128]{1,0:T(1,128)}', space=vmem, size = 0x12000, scoped, tag = 'internal scratch']
  #allocation2 [shape = 'bf16[9,8,4]{2,1,0:T(8,128)(2,1)}', space=vmem, size = 0x4800, scoped, tag = 'scratch operand']
  #allocation3 [shape = 'f32[8,1]{1,0:T(8,128)}', space=vmem, size = 0x1000, scoped, tag = 'scratch operand']
  #allocation4 [shape = 'f32[8,256]{1,0:T(8,128)}', space=vmem, size = 0x2000, scoped, tag = 'scratch operand']
  %s0 = inlined_call_operand.vmem [shape: f32[9,8,4], index: 0, kind: input, shape index: {}]
  %s1 = inlined_call_operand.vmem [shape: f32[9,8,4], index: 1, kind: input, shape index: {}]
  %s2 = inlined_call_operand.vmem [shape: f32[8,1], index: 2, kind: input, shape index: {}]
  %s3 = inlined_call_operand.vmem [shape: f32[8,1], index: 3, kind: input, shape index: {}]
  %s4 = inlined_call_operand.vmem [shape: bf16[2,9,8,4], index: 4, kind: input, shape index: {}]
  %s5 = inlined_call_operand.vmem [shape: f32[2,8,1], index: 5, kind: input, shape index: {}]
  %s6 = inlined_call_operand.vmem [shape: bf16[2,4,384], index: 6, kind: input, shape index: {}]
  %s7 = inlined_call_operand.hbm [shape: f32[2,8,256], index: 7, kind: output, shape index: {}]
  %s8 = sld [smem:[#allocation0]]
  $region65: #{tpu_custom_call.1} parent=0
    _
  %s10 = ssub.s32 1, %s8
  %s11 = scalar_select 0, %s10, %s8
  $region1: #{tpu_custom_call.1} parent=0
    #allocation5 [shape = 'u8[16384]{0}', space=vmem, size = 0x4000, scoped, tag = 'output window, operand 0']
    #allocation6 [shape = 's32[2]{0}', space=sflag, size = 0x8, scoped, tag = 'scoped memory for tpu_custom_call.1']
    %12 = vsyncpa [#allocation6], 0
    %s13 = scalar_lea.sflag [#allocation6], 1
    %14 = vsyncpa %s13, 0
    loop: start=0, step=1, limit=4
    $region2: #{tpu_custom_call.1} parent=1 // loop_pre_header
      _
    $region3: #{tpu_custom_call.1} parent=1 // loop_header
      %s16 = sphi 0, %s20
      %p17 = scmp.ge.s32.totalorder %s16, 4
      %s23 = sphi 0, %s35
      %s24 = sphi 0, %s31
      %s25 = sphi 0, %s23
      %s26 = sphi 0, %s24
      %s27 = sphi 0, %s25
      %s28 = sphi 0, %s26
      %s36 = sphi 0, %s36
      %s38 = sphi 0, %s36
      %s39 = sphi 0, %s38
      %s53 = sphi 0, %s39
      %s57 = sphi 0, %s57
      %s59 = sphi 0, %s57
      %s60 = sphi 0, %s59
      %s74 = sphi 0, %s60
      %s78 = sphi 0, %s78
      %s80 = sphi 0, %s78
      %s81 = sphi 0, %s80
      %s95 = sphi 0, %s81
      %s99 = sphi 0, %s99
      %s101 = sphi 0, %s99
      %s102 = sphi 0, %s101
      %s116 = sphi 0, %s102
      %s122 = sphi 0, %s124
      %s125 = sphi 0, %s122
      %s126 = sphi 0, %s125
      %s142 = sphi 0, %s126
      %s148 = sphi 0, %s150
      %s151 = sphi 0, %s148
      %s152 = sphi 0, %s151
      %s168 = sphi 0, %s152
      %s174 = sphi 0, %s176
      %s177 = sphi 0, %s174
      %s178 = sphi 0, %s177
      %s194 = sphi 0, %s178
      %s202 = sphi 0, %s204
      %s205 = sphi 0, %s202
      %s206 = sphi 0, %s205
      %s222 = sphi 0, %s206
    $region4: #{tpu_custom_call.1} parent=1 // loop_header_branch
      %19 = sbr.rel (%p17) target = $region8
    $region5: #{tpu_custom_call.1} parent=1 // loop_body
      %s21 = ssub.s32 %s16, 1
      %s22 = ssub.s32 %s16, 2
      %s29 = sadd.s32 1, %s24
      %p30 = scmp.ge.s32.totalorder %s29, 1
      %s31 = scalar_select %p30, 0, %s29
      %s32 = sadd.s32 1, %s23
      %s33 = scalar_select %p30, %s32, %s23
      %p34 = scmp.ge.s32.totalorder %s33, 2
      %s35 = scalar_select %p34, 0, %s33
      %s37 = sadd.s32 %s36, 1
      %p40 = scmp.eq.s32.totalorder %s16, 1
      %p41 = scmp.ne.s32.totalorder %s36, %s38
      %p42 = scmp.eq.s32.totalorder %s16, 0
      %p43 = por %p41, %p42
      %p44 = scmp.ne.s32.totalorder %s36, %s38
      %p45 = scmp.eq.s32.totalorder %s21, 1
      %p46 = por %p44, %p45
      %p47 = scmp.ne.s32.totalorder %s38, %s39
      %p48 = scmp.eq.s32.totalorder %s21, 0
      %p49 = por %p47, %p48
      %p50 = scmp.ne.s32.totalorder %s38, %s39
      %p51 = scmp.eq.s32.totalorder %s22, 1
      %p52 = por %p50, %p51
      %p54 = scmp.ne.s32.totalorder %s39, %s53
      %p55 = scmp.eq.s32.totalorder %s22, 0
      %p56 = por %p54, %p55
      %s58 = sadd.s32 %s57, 1
      %p61 = scmp.eq.s32.totalorder %s16, 1
      %p62 = scmp.ne.s32.totalorder %s57, %s59
      %p63 = scmp.eq.s32.totalorder %s16, 0
      %p64 = por %p62, %p63
      %p65 = scmp.ne.s32.totalorder %s57, %s59
      %p66 = scmp.eq.s32.totalorder %s21, 1
      %p67 = por %p65, %p66
      %p68 = scmp.ne.s32.totalorder %s59, %s60
      %p69 = scmp.eq.s32.totalorder %s21, 0
      %p70 = por %p68, %p69
      %p71 = scmp.ne.s32.totalorder %s59, %s60
      %p72 = scmp.eq.s32.totalorder %s22, 1
      %p73 = por %p71, %p72
      %p75 = scmp.ne.s32.totalorder %s60, %s74
      %p76 = scmp.eq.s32.totalorder %s22, 0
      %p77 = por %p75, %p76
      %s79 = sadd.s32 %s78, 1
      %p82 = scmp.eq.s32.totalorder %s16, 1
      %p83 = scmp.ne.s32.totalorder %s78, %s80
      %p84 = scmp.eq.s32.totalorder %s16, 0
      %p85 = por %p83, %p84
      %p86 = scmp.ne.s32.totalorder %s78, %s80
      %p87 = scmp.eq.s32.totalorder %s21, 1
      %p88 = por %p86, %p87
      %p89 = scmp.ne.s32.totalorder %s80, %s81
      %p90 = scmp.eq.s32.totalorder %s21, 0
      %p91 = por %p89, %p90
      %p92 = scmp.ne.s32.totalorder %s80, %s81
      %p93 = scmp.eq.s32.totalorder %s22, 1
      %p94 = por %p92, %p93
      %p96 = scmp.ne.s32.totalorder %s81, %s95
      %p97 = scmp.eq.s32.totalorder %s22, 0
      %p98 = por %p96, %p97
      %s100 = sadd.s32 %s99, 1
      %p103 = scmp.eq.s32.totalorder %s16, 1
      %p104 = scmp.ne.s32.totalorder %s99, %s101
      %p105 = scmp.eq.s32.totalorder %s16, 0
      %p106 = por %p104, %p105
      %p107 = scmp.ne.s32.totalorder %s99, %s101
      %p108 = scmp.eq.s32.totalorder %s21, 1
      %p109 = por %p107, %p108
      %p110 = scmp.ne.s32.totalorder %s101, %s102
      %p111 = scmp.eq.s32.totalorder %s21, 0
      %p112 = por %p110, %p111
      %p113 = scmp.ne.s32.totalorder %s101, %s102
      %p114 = scmp.eq.s32.totalorder %s22, 1
      %p115 = por %p113, %p114
      %p117 = scmp.ne.s32.totalorder %s102, %s116
      %p118 = scmp.eq.s32.totalorder %s22, 0
      %p119 = por %p117, %p118
      %s120 = ssub.s32 %s23, %s35
      %p121 = scmp.eq.s32.totalorder %s120, 0
      %s123 = sadd.s32 %s122, 1
      %s124 = scalar_select %p121, %s122, %s123
      %p127 = pneg %p121
      %p128 = scmp.eq.s32.totalorder %s16, 1
      %p129 = por %p127, %p128
      %p130 = scmp.ne.s32.totalorder %s122, %s125
      %p131 = scmp.eq.s32.totalorder %s16, 0
      %p132 = por %p130, %p131
      %p133 = scmp.ne.s32.totalorder %s122, %s125
      %p134 = scmp.eq.s32.totalorder %s21, 1
      %p135 = por %p133, %p134
      %p136 = scmp.ne.s32.totalorder %s125, %s126
      %p137 = scmp.eq.s32.totalorder %s21, 0
      %p138 = por %p136, %p137
      %p139 = scmp.ne.s32.totalorder %s125, %s126
      %p140 = scmp.eq.s32.totalorder %s22, 1
      %p141 = por %p139, %p140
      %p143 = scmp.ne.s32.totalorder %s126, %s142
      %p144 = scmp.eq.s32.totalorder %s22, 0
      %p145 = por %p143, %p144
      %s146 = ssub.s32 %s23, %s35
      %p147 = scmp.eq.s32.totalorder %s146, 0
      %s149 = sadd.s32 %s148, 1
      %s150 = scalar_select %p147, %s148, %s149
      %p153 = pneg %p147
      %p154 = scmp.eq.s32.totalorder %s16, 1
      %p155 = por %p153, %p154
      %p156 = scmp.ne.s32.totalorder %s148, %s151
      %p157 = scmp.eq.s32.totalorder %s16, 0
      %p158 = por %p156, %p157
      %p159 = scmp.ne.s32.totalorder %s148, %s151
      %p160 = scmp.eq.s32.totalorder %s21, 1
      %p161 = por %p159, %p160
      %p162 = scmp.ne.s32.totalorder %s151, %s152
      %p163 = scmp.eq.s32.totalorder %s21, 0
      %p164 = por %p162, %p163
      %p165 = scmp.ne.s32.totalorder %s151, %s152
      %p166 = scmp.eq.s32.totalorder %s22, 1
      %p167 = por %p165, %p166
      %p169 = scmp.ne.s32.totalorder %s152, %s168
      %p170 = scmp.eq.s32.totalorder %s22, 0
      %p171 = por %p169, %p170
      %s172 = ssub.s32 %s23, %s35
      %p173 = scmp.eq.s32.totalorder %s172, 0
      %s175 = sadd.s32 %s174, 1
      %s176 = scalar_select %p173, %s174, %s175
      %p179 = pneg %p173
      %p180 = scmp.eq.s32.totalorder %s16, 1
      %p181 = por %p179, %p180
      %p182 = scmp.ne.s32.totalorder %s174, %s177
      %p183 = scmp.eq.s32.totalorder %s16, 0
      %p184 = por %p182, %p183
      %p185 = scmp.ne.s32.totalorder %s174, %s177
      %p186 = scmp.eq.s32.totalorder %s21, 1
      %p187 = por %p185, %p186
      %p188 = scmp.ne.s32.totalorder %s177, %s178
      %p189 = scmp.eq.s32.totalorder %s21, 0
      %p190 = por %p188, %p189
      %p191 = scmp.ne.s32.totalorder %s177, %s178
      %p192 = scmp.eq.s32.totalorder %s22, 1
      %p193 = por %p191, %p192
      %p195 = scmp.ne.s32.totalorder %s178, %s194
      %p196 = scmp.eq.s32.totalorder %s22, 0
      %p197 = por %p195, %p196
      %s198 = ssub.s32 %s23, %s35
      %s199 = ssub.s32 %s24, %s31
      %s200 = sor.u32 %s198, %s199
      %p201 = scmp.eq.s32.totalorder %s200, 0
      %s203 = sadd.s32 %s202, 1
      %s204 = scalar_select %p201, %s202, %s203
      %p207 = pneg %p201
      %p208 = scmp.eq.s32.totalorder %s16, 1
      %p209 = por %p207, %p208
      %p210 = scmp.ne.s32.totalorder %s202, %s205
      %p211 = scmp.eq.s32.totalorder %s16, 0
      %p212 = por %p210, %p211
      %p213 = scmp.ne.s32.totalorder %s202, %s205
      %p214 = scmp.eq.s32.totalorder %s21, 1
      %p215 = por %p213, %p214
      %p216 = scmp.ne.s32.totalorder %s205, %s206
      %p217 = scmp.eq.s32.totalorder %s21, 0
      %p218 = por %p216, %p217
      %p219 = scmp.ne.s32.totalorder %s205, %s206
      %p220 = scmp.eq.s32.totalorder %s22, 1
      %p221 = por %p219, %p220
      %p223 = scmp.ne.s32.totalorder %s206, %s222
      %p224 = scmp.eq.s32.totalorder %s22, 0
      %p225 = por %p223, %p224
      %p226 = scmp.le.s32.totalorder 1, %s16
      %p227 = scmp.lt.s32.totalorder %s16, 3
      %p228 = pnand %p226, %p227
      %p229 = pneg %p228
      // Predicated region
      $region9: #{tpu_custom_call.1} parent=5 // pred_check
        _
      $region10: #{tpu_custom_call.1} parent=5 // pred_check_branch
        %231 = sbr.rel (%p228) target = $region12
      $region11: #{tpu_custom_call.1} parent=5 // pred_region
        %s232 = ssub.s32 %s16, 1
        // Predicated region
        $region13: #{tpu_custom_call.1} parent=11 // pred_check
          %p233 = pneg %p49
        $region14: #{tpu_custom_call.1} parent=11 // pred_check_branch
          %235 = sbr.rel (%p233) target = $region16
        $region15: #{tpu_custom_call.1} parent=11 // pred_region
          _
        $region16: #{tpu_custom_call.1} parent=11 // pred_fallthru
          _
        // Predicated region
        $region17: #{tpu_custom_call.1} parent=11 // pred_check
          %p236 = pneg %p70
        $region18: #{tpu_custom_call.1} parent=11 // pred_check_branch
          %238 = sbr.rel (%p236) target = $region20
        $region19: #{tpu_custom_call.1} parent=11 // pred_region
          _
        $region20: #{tpu_custom_call.1} parent=11 // pred_fallthru
          _
        // Predicated region
        $region21: #{tpu_custom_call.1} parent=11 // pred_check
          %p239 = pneg %p91
        $region22: #{tpu_custom_call.1} parent=11 // pred_check_branch
          %241 = sbr.rel (%p239) target = $region24
        $region23: #{tpu_custom_call.1} parent=11 // pred_region
          _
        $region24: #{tpu_custom_call.1} parent=11 // pred_fallthru
          _
        // Predicated region
        $region25: #{tpu_custom_call.1} parent=11 // pred_check
          %p242 = pneg %p112
        $region26: #{tpu_custom_call.1} parent=11 // pred_check_branch
          %244 = sbr.rel (%p242) target = $region28
        $region27: #{tpu_custom_call.1} parent=11 // pred_region
          _
        $region28: #{tpu_custom_call.1} parent=11 // pred_fallthru
          _
      $region12: #{tpu_custom_call.1} parent=5 // pred_fallthru
        _
      %p245 = scmp.lt.s32.totalorder %s16, 2
      // Predicated region
      $region29: #{tpu_custom_call.1} parent=5 // pred_check
        %p246 = pneg %p245
      $region30: #{tpu_custom_call.1} parent=5 // pred_check_branch
        %248 = sbr.rel (%p246) target = $region32
      $region31: #{tpu_custom_call.1} parent=5 // pred_region
        // Predicated region
        $region33: #{tpu_custom_call.1} parent=31 // pred_check
          %p249 = pneg %p132
        $region34: #{tpu_custom_call.1} parent=31 // pred_check_branch
          %251 = sbr.rel (%p249) target = $region36
        $region35: #{tpu_custom_call.1} parent=31 // pred_region
          %p252 = scmp.lt.s32.totalorder %s23, 1
          %s253 = scalar_select %p252, %s23, 1
          %s254 = smul.addr %s253, 9
          %s255 = smul.addr %s254, 4
          %s256 = scalar_lea.vmem %s4, %s255
        $region36: #{tpu_custom_call.1} parent=31 // pred_fallthru
          _
        // Predicated region
        $region37: #{tpu_custom_call.1} parent=31 // pred_check
          %p257 = pneg %p158
        $region38: #{tpu_custom_call.1} parent=31 // pred_check_branch
          %259 = sbr.rel (%p257) target = $region40
        $region39: #{tpu_custom_call.1} parent=31 // pred_region
          %p260 = scmp.lt.s32.totalorder %s23, 1
          %s261 = scalar_select %p260, %s23, 1
          %s262 = smul.addr %s261, 8
          %s263 = scalar_lea.vmem %s5, %s262
        $region40: #{tpu_custom_call.1} parent=31 // pred_fallthru
          _
        // Predicated region
        $region41: #{tpu_custom_call.1} parent=31 // pred_check
          %p264 = pneg %p184
        $region42: #{tpu_custom_call.1} parent=31 // pred_check_branch
          %266 = sbr.rel (%p264) target = $region44
        $region43: #{tpu_custom_call.1} parent=31 // pred_region
          %p267 = scmp.lt.s32.totalorder %s23, 1
          %s268 = scalar_select %p267, %s23, 1
          %s269 = smul.addr %s268, 3
          %s270 = smul.addr %s269, 2
          %s271 = scalar_lea.vmem %s6, %s270
        $region44: #{tpu_custom_call.1} parent=31 // pred_fallthru
          _
      $region32: #{tpu_custom_call.1} parent=5 // pred_fallthru
        _
      %p272 = scmp.le.s32.totalorder 1, %s16
      %p273 = scmp.lt.s32.totalorder %s16, 3
      %p274 = pnand %p272, %p273
      %p275 = pneg %p274
      // Predicated region
      $region45: #{tpu_custom_call.1} parent=5 // pred_check
        _
      $region46: #{tpu_custom_call.1} parent=5 // pred_check_branch
        %277 = sbr.rel (%p274) target = $region48
      $region47: #{tpu_custom_call.1} parent=5 // pred_region
        %s278 = ssub.s32 %s16, 1
        %p279 = pneg %p49
        %p280 = pneg %p46
        %p281 = pneg %p70
        %p282 = pneg %p67
        %p283 = pneg %p91
        %p284 = pneg %p88
        %p285 = pneg %p112
        %p286 = pneg %p109
        %p287 = scmp.lt.s32.totalorder %s25, 1
        %s288 = scalar_select %p287, %s25, 1
        %s289 = smul.addr %s288, 9
        %s290 = smul.addr %s289, 4
        %s291 = scalar_lea.vmem %s4, %s290
        %p292 = pneg %p138
        %p293 = pneg %p135
        %p294 = scmp.lt.s32.totalorder %s25, 1
        %s295 = scalar_select %p294, %s25, 1
        %s296 = smul.addr %s295, 8
        %s297 = scalar_lea.vmem %s5, %s296
        %p298 = pneg %p164
        %p299 = pneg %p161
        %p300 = scmp.lt.s32.totalorder %s25, 1
        %s301 = scalar_select %p300, %s25, 1
        %s302 = smul.addr %s301, 3
        %s303 = smul.addr %s302, 2
        %s304 = scalar_lea.vmem %s6, %s303
        %p305 = pneg %p190
        %p306 = pneg %p187
        %p307 = pneg %p218
        %p308 = pneg %p215
        %s309 = sand.u32 %s205, 1
        %s310 = scalar_lea.sflag [#allocation6], %s309
        %s311 = sand.u32 %s205, 1
        %s312 = smul.addr %s311, 16
        %s313 = scalar_lea.vmem [#allocation5], %s312
        %p314 = scmp.lt.s32.totalorder %s25, 1
        %s315 = scalar_select %p314, %s25, 1
        %s316 = smul.addr %s315, 9
        %s317 = smul.addr %s316, 4
        %s318 = scalar_lea.vmem %s4, %s317
        %p319 = scmp.lt.s32.totalorder %s25, 1
        %s320 = scalar_select %p319, %s25, 1
        %s321 = smul.addr %s320, 8
        %s322 = scalar_lea.vmem %s5, %s321
        %p323 = scmp.lt.s32.totalorder %s25, 1
        %s324 = scalar_select %p323, %s25, 1
        %s325 = smul.addr %s324, 3
        %s326 = smul.addr %s325, 2
        %s327 = scalar_lea.vmem %s6, %s326
        %s328 = smul.u32 2, %s26
        %p330 = scmp.eq.s32.totalorder %s26, 0
        // Predicated region
        $region49: #{tpu_custom_call.1} parent=47 // pred_check
          %p331 = pneg %p330
        $region50: #{tpu_custom_call.1} parent=47 // pred_check_branch
          %333 = sbr.rel (%p331) target = $region52
        $region51: #{tpu_custom_call.1} parent=47 // pred_region
          %v334 = vld [vmem:[%s0] sm:$0xff]
          %v335 = vld [vmem:[%s0 + $0x8] sm:$0xff]
          %v336 = vld [vmem:[%s0 + $0x10] sm:$0xff]
          %v337 = vld [vmem:[%s0 + $0x18] sm:$0xff]
          %v338 = vld [vmem:[%s0 + $0x20] sm:$0xff]
          %v339 = vld [vmem:[%s0 + $0x28] sm:$0xff]
          %v340 = vld [vmem:[%s0 + $0x30] sm:$0xff]
          %v341 = vld [vmem:[%s0 + $0x38] sm:$0xff]
          %v342 = vld [vmem:[%s0 + $0x40] sm:$0xff]
          %v343 = vld [vmem:[%s318] sm:$0xf]
          %v344 = vld [vmem:[%s318 + $0x4] sm:$0xf]
          %v345 = vld [vmem:[%s318 + $0x8] sm:$0xf]
          %v346 = vld [vmem:[%s318 + $0xc] sm:$0xf]
          %v347 = vld [vmem:[%s318 + $0x10] sm:$0xf]
          %v348 = vld [vmem:[%s318 + $0x14] sm:$0xf]
          %v349 = vld [vmem:[%s318 + $0x18] sm:$0xf]
          %v350 = vld [vmem:[%s318 + $0x1c] sm:$0xf]
          %v351 = vld [vmem:[%s318 + $0x20] sm:$0xf]
          %v352 = vunpack.c.l.bf16 %v343
          %v353 = vunpack.c.l.bf16 %v344
          %v354 = vunpack.c.l.bf16 %v345
          %v355 = vunpack.c.l.bf16 %v346
          %v356 = vunpack.c.l.bf16 %v347
          %v357 = vunpack.c.l.bf16 %v348
          %v358 = vunpack.c.l.bf16 %v349
          %v359 = vunpack.c.l.bf16 %v350
          %v360 = vunpack.c.l.bf16 %v351
          %v361 = vld [vmem:[%s1] sm:$0xff]
          %v362 = vld [vmem:[%s1 + $0x8] sm:$0xff]
          %v363 = vld [vmem:[%s1 + $0x10] sm:$0xff]
          %v364 = vld [vmem:[%s1 + $0x18] sm:$0xff]
          %v365 = vld [vmem:[%s1 + $0x20] sm:$0xff]
          %v366 = vld [vmem:[%s1 + $0x28] sm:$0xff]
          %v367 = vld [vmem:[%s1 + $0x30] sm:$0xff]
          %v368 = vld [vmem:[%s1 + $0x38] sm:$0xff]
          %v369 = vld [vmem:[%s1 + $0x40] sm:$0xff]
          %v370 = vmul.f32 %v352, %v361
          %v371 = vmul.f32 %v353, %v362
          %v372 = vmul.f32 %v354, %v363
          %v373 = vmul.f32 %v355, %v364
          %v374 = vmul.f32 %v356, %v365
          %v375 = vmul.f32 %v357, %v366
          %v376 = vmul.f32 %v358, %v367
          %v377 = vmul.f32 %v359, %v368
          %v378 = vmul.f32 %v360, %v369
          %v379 = vadd.f32 %v334, %v370
          %v380 = vadd.f32 %v335, %v371
          %v381 = vadd.f32 %v336, %v372
          %v382 = vadd.f32 %v337, %v373
          %v383 = vadd.f32 %v338, %v374
          %v384 = vadd.f32 %v339, %v375
          %v385 = vadd.f32 %v340, %v376
          %v386 = vadd.f32 %v341, %v377
          %v387 = vadd.f32 %v342, %v378
          %v388 = vpack.c.bf16 %v379, %v379
          %v389 = vpack.c.bf16 %v380, %v380
          %v390 = vpack.c.bf16 %v381, %v381
          %v391 = vpack.c.bf16 %v382, %v382
          %v392 = vpack.c.bf16 %v383, %v383
          %v393 = vpack.c.bf16 %v384, %v384
          %v394 = vpack.c.bf16 %v385, %v385
          %v395 = vpack.c.bf16 %v386, %v386
          %v396 = vpack.c.bf16 %v387, %v387
          %vm397 = vcmask 27648
          %398 = vst.msk [vmem:[#allocation2] sm:$0xf] %vm397, %v388
          %399 = vst.msk [vmem:[#allocation2 + $0x4] sm:$0xf] %vm397, %v389
          %400 = vst.msk [vmem:[#allocation2 + $0x8] sm:$0xf] %vm397, %v390
          %401 = vst.msk [vmem:[#allocation2 + $0xc] sm:$0xf] %vm397, %v391
          %402 = vst.msk [vmem:[#allocation2 + $0x10] sm:$0xf] %vm397, %v392
          %403 = vst.msk [vmem:[#allocation2 + $0x14] sm:$0xf] %vm397, %v393
          %404 = vst.msk [vmem:[#allocation2 + $0x18] sm:$0xf] %vm397, %v394
          %405 = vst.msk [vmem:[#allocation2 + $0x1c] sm:$0xf] %vm397, %v395
          %406 = vst.msk [vmem:[#allocation2 + $0x20] sm:$0xf] %vm397, %v396
          %v407 = vld [vmem:[%s2] sm:$0xff]
          %v408 = vld [vmem:[%s322] sm:$0xff]
          %v409 = vld [vmem:[%s3] sm:$0xff]
          %v410 = vmul.f32 %v408, %v409
          %v411 = vadd.f32 %v407, %v410
          %vm412 = vcmask 7168
          %413 = vst.msk [vmem:[#allocation3] sm:$0xff] %vm412, %v411
        $region52: #{tpu_custom_call.1} parent=47 // pred_fallthru
          _
        %v414 = vld [vmem:[%s327] sm:$0x3f]
        %415 = vst [vmem:[#allocation4] sm:$0xff] 0.0
        %416 = vst [vmem:[#allocation4 + $0x8] sm:$0xff] 0.0
        %v417 = vld [vmem:[#allocation4] sm:$0xff]
        %v418 = vld [vmem:[#allocation4 + $0x8] sm:$0xff]
        %v419 = vld [vmem:[#allocation2] sm:$0xf]
        %v422 = vunpack.c.l.s4 1983009808
        %v423 = vunpack.c.0.s8 %v422
        %v424 = vlaneseq
        %v425 = vshrl.u32 %v424, 7
        %v426 = vsub.s32 %v423, %v425
        %v427 = vrot.slane %v414, %v426
        %v428 = vcombine.high %v427, %v427
        %vm429 = vcmask 31744
        %v431 = vsel %vm429, %v419, 0
        %vm433 = vcmask 1041408
        %v435 = vsel %vm433, %v427, 0
        %v438 = vsel %vm433, %v428, 0
        %440 = vmatprep.subr.bf16.mxu0 0
        %441 = vmatpush1.bf16.msra.mxu0 0
        %442 = vmatprep.subr.bf16.mxu0 0
        %443 = vmatpush1.bf16.msra.mxu0 0
        %444 = vmatprep.subr.bf16.mxu0 0
        %445 = vmatpush1.bf16.msra.mxu0 0
        %446 = vmatprep.subr.bf16.mxu0 0
        %447 = vmatpush1.bf16.msra.mxu0 0
        %448 = vmatprep.subr.bf16.mxu0 0
        %449 = vmatpush1.bf16.msra.mxu0 0
        %450 = vmatprep.subr.bf16.mxu0 0
        %451 = vmatpush1.bf16.msra.mxu0 0
        %452 = vmatprep.subr.bf16.mxu0 0
        %453 = vmatpush1.bf16.msra.mxu0 0
        %454 = vmatprep.subr.bf16.mxu0 %v438
        %455 = vmatpush1.bf16.msra.mxu0 %v435
        %456 = vmatprep.subr.bf16.mxu0 0
        %457 = vmatpush2.bf16.msra.mxu0 0
        %458 = vmatprep.subr.bf16.mxu0 0
        %459 = vmatpush2.bf16.msra.mxu0 0
        %460 = vmatprep.subr.bf16.mxu0 0
        %461 = vmatpush2.bf16.msra.mxu0 0
        %462 = vmatprep.subr.bf16.mxu0 0
        %463 = vmatpush2.bf16.msra.mxu0 0
        %464 = vmatprep.subr.bf16.mxu0 0
        %465 = vmatpush2.bf16.msra.mxu0 0
        %466 = vmatprep.subr.bf16.mxu0 0
        %467 = vmatpush2.bf16.msra.mxu0 0
        %468 = vmatprep.subr.bf16.mxu0 0
        %469 = vmatpush2.bf16.msra.mxu0 0
        %470 = vmatprep.subr.bf16.mxu0 0
        %471 = vmatpush2.bf16.msra.mxu0 0
        %472 = vmatprep.mubr.bf16.mxu0 0
        %473 = vmatmul.mubr.bf16.gmra.mxu0 %v431
        %v474 = vpop.f32.mrf.mxu0
        %v475 = vadd.f32 0.0, %v474
        %v476 = vpop.f32.mrf.mxu0
        %v477 = vadd.f32 0.0, %v476
        %v478 = vpop.f32.mrf.mxu0
        %v479 = vpop.f32.mrf.mxu0
        %480 = vdwg.mxu0
        %v481 = vadd.f32 %v417, %v475
        %v482 = vadd.f32 %v418, %v477
        %483 = vst [vmem:[#allocation4] sm:$0xff] %v481
        %484 = vst [vmem:[#allocation4 + $0x8] sm:$0xff] %v482
        %v485 = vld [vmem:[#allocation4] sm:$0xff]
        %v486 = vld [vmem:[#allocation4 + $0x8] sm:$0xff]
        %s487 = scalar_lea.vmem [#allocation2], 4
        %v488 = vld [vmem:[%s487] sm:$0xf]
        %v489 = vcombine.high %v414, %v414
        %v491 = vunpack.c.l.s4 1983009808
        %v492 = vunpack.c.0.s8 %v491
        %v493 = vlaneseq
        %v494 = vshrl.u32 %v493, 7
        %v495 = vsub.s32 %v492, %v494
        %v496 = vrot.slane %v489, %v495
        %497 = vrot.lane.b32.xlu0 %v427, 127
        %v498 = vpop.permute.xlu0 %497
        %499 = vrot.lane.b32.xlu0 %v428, 127
        %v500 = vpop.permute.xlu0 %499
        %501 = vrot.lane.b32.xlu0 %v496, 127
        %v502 = vpop.permute.xlu0 %501
        %vm503 = vcmask 1039360
        %v504 = vsel %vm503, %v498, %v500
        %v505 = vsel %vm503, %v500, %v502
        %v507 = vsel %vm429, %v488, 0
        %v510 = vsel %vm433, %v504, 0
        %v513 = vsel %vm433, %v505, 0
        %515 = vmatprep.subr.bf16.mxu0 0
        %516 = vmatpush1.bf16.msra.mxu0 0
        %517 = vmatprep.subr.bf16.mxu0 0
        %518 = vmatpush1.bf16.msra.mxu0 0
        %519 = vmatprep.subr.bf16.mxu0 0
        %520 = vmatpush1.bf16.msra.mxu0 0
        %521 = vmatprep.subr.bf16.mxu0 0
        %522 = vmatpush1.bf16.msra.mxu0 0
        %523 = vmatprep.subr.bf16.mxu0 0
        %524 = vmatpush1.bf16.msra.mxu0 0
        %525 = vmatprep.subr.bf16.mxu0 0
        %526 = vmatpush1.bf16.msra.mxu0 0
        %527 = vmatprep.subr.bf16.mxu0 0
        %528 = vmatpush1.bf16.msra.mxu0 0
        %529 = vmatprep.subr.bf16.mxu0 %v513
        %530 = vmatpush1.bf16.msra.mxu0 %v510
        %531 = vmatprep.subr.bf16.mxu0 0
        %532 = vmatpush2.bf16.msra.mxu0 0
        %533 = vmatprep.subr.bf16.mxu0 0
        %534 = vmatpush2.bf16.msra.mxu0 0
        %535 = vmatprep.subr.bf16.mxu0 0
        %536 = vmatpush2.bf16.msra.mxu0 0
        %537 = vmatprep.subr.bf16.mxu0 0
        %538 = vmatpush2.bf16.msra.mxu0 0
        %539 = vmatprep.subr.bf16.mxu0 0
        %540 = vmatpush2.bf16.msra.mxu0 0
        %541 = vmatprep.subr.bf16.mxu0 0
        %542 = vmatpush2.bf16.msra.mxu0 0
        %543 = vmatprep.subr.bf16.mxu0 0
        %544 = vmatpush2.bf16.msra.mxu0 0
        %545 = vmatprep.subr.bf16.mxu0 0
        %546 = vmatpush2.bf16.msra.mxu0 0
        %547 = vmatprep.mubr.bf16.mxu0 0
        %548 = vmatmul.mubr.bf16.gmra.mxu0 %v507
        %v549 = vpop.f32.mrf.mxu0
        %v550 = vadd.f32 0.0, %v549
        %v551 = vpop.f32.mrf.mxu0
        %v552 = vadd.f32 0.0, %v551
        %v553 = vpop.f32.mrf.mxu0
        %v554 = vpop.f32.mrf.mxu0
        %555 = vdwg.mxu0
        %v556 = vadd.f32 %v485, %v550
        %v557 = vadd.f32 %v486, %v552
        %558 = vst [vmem:[#allocation4] sm:$0xff] %v556
        %559 = vst [vmem:[#allocation4 + $0x8] sm:$0xff] %v557
        %v560 = vld [vmem:[#allocation4] sm:$0xff]
        %v561 = vld [vmem:[#allocation4 + $0x8] sm:$0xff]
        %s562 = scalar_lea.vmem [#allocation2], 8
        %v563 = vld [vmem:[%s562] sm:$0xf]
        %564 = vrot.lane.b32.xlu0 %v427, 126
        %v565 = vpop.permute.xlu0 %564
        %566 = vrot.lane.b32.xlu0 %v428, 126
        %v567 = vpop.permute.xlu0 %566
        %568 = vrot.lane.b32.xlu0 %v496, 126
        %v569 = vpop.permute.xlu0 %568
        %vm570 = vcmask 1031168
        %v571 = vsel %vm570, %v565, %v567
        %v572 = vsel %vm570, %v567, %v569
        %v574 = vsel %vm429, %v563, 0
        %v577 = vsel %vm433, %v571, 0
        %v580 = vsel %vm433, %v572, 0
        %582 = vmatprep.subr.bf16.mxu0 0
        %583 = vmatpush1.bf16.msra.mxu0 0
        %584 = vmatprep.subr.bf16.mxu0 0
        %585 = vmatpush1.bf16.msra.mxu0 0
        %586 = vmatprep.subr.bf16.mxu0 0
        %587 = vmatpush1.bf16.msra.mxu0 0
        %588 = vmatprep.subr.bf16.mxu0 0
        %589 = vmatpush1.bf16.msra.mxu0 0
        %590 = vmatprep.subr.bf16.mxu0 0
        %591 = vmatpush1.bf16.msra.mxu0 0
        %592 = vmatprep.subr.bf16.mxu0 0
        %593 = vmatpush1.bf16.msra.mxu0 0
        %594 = vmatprep.subr.bf16.mxu0 0
        %595 = vmatpush1.bf16.msra.mxu0 0
        %596 = vmatprep.subr.bf16.mxu0 %v580
        %597 = vmatpush1.bf16.msra.mxu0 %v577
        %598 = vmatprep.subr.bf16.mxu0 0
        %599 = vmatpush2.bf16.msra.mxu0 0
        %600 = vmatprep.subr.bf16.mxu0 0
        %601 = vmatpush2.bf16.msra.mxu0 0
        %602 = vmatprep.subr.bf16.mxu0 0
        %603 = vmatpush2.bf16.msra.mxu0 0
        %604 = vmatprep.subr.bf16.mxu0 0
        %605 = vmatpush2.bf16.msra.mxu0 0
        %606 = vmatprep.subr.bf16.mxu0 0
        %607 = vmatpush2.bf16.msra.mxu0 0
        %608 = vmatprep.subr.bf16.mxu0 0
        %609 = vmatpush2.bf16.msra.mxu0 0
        %610 = vmatprep.subr.bf16.mxu0 0
        %611 = vmatpush2.bf16.msra.mxu0 0
        %612 = vmatprep.subr.bf16.mxu0 0
        %613 = vmatpush2.bf16.msra.mxu0 0
        %614 = vmatprep.mubr.bf16.mxu0 0
        %615 = vmatmul.mubr.bf16.gmra.mxu0 %v574
        %v616 = vpop.f32.mrf.mxu0
        %v617 = vadd.f32 0.0, %v616
        %v618 = vpop.f32.mrf.mxu0
        %v619 = vadd.f32 0.0, %v618
        %v620 = vpop.f32.mrf.mxu0
        %v621 = vpop.f32.mrf.mxu0
        %622 = vdwg.mxu0
        %v623 = vadd.f32 %v560, %v617
        %v624 = vadd.f32 %v561, %v619
        %625 = vst [vmem:[#allocation4] sm:$0xff] %v623
        %626 = vst [vmem:[#allocation4 + $0x8] sm:$0xff] %v624
        %v627 = vld [vmem:[#allocation4] sm:$0xff]
        %v628 = vld [vmem:[#allocation4 + $0x8] sm:$0xff]
        %s629 = scalar_lea.vmem [#allocation2], 12
        %v630 = vld [vmem:[%s629] sm:$0xf]
        %631 = vrot.lane.b32.xlu0 %v427, 112
        %v632 = vpop.permute.xlu0 %631
        %633 = vrot.lane.b32.xlu0 %v428, 112
        %v634 = vpop.permute.xlu0 %633
        %635 = vrot.lane.b32.xlu0 %v496, 112
        %v636 = vpop.permute.xlu0 %635
        %vm637 = vcmask 916480
        %v638 = vsel %vm637, %v632, %v634
        %v639 = vsel %vm637, %v634, %v636
        %v641 = vsel %vm429, %v630, 0
        %v644 = vsel %vm433, %v638, 0
        %v647 = vsel %vm433, %v639, 0
        %649 = vmatprep.subr.bf16.mxu0 0
        %650 = vmatpush1.bf16.msra.mxu0 0
        %651 = vmatprep.subr.bf16.mxu0 0
        %652 = vmatpush1.bf16.msra.mxu0 0
        %653 = vmatprep.subr.bf16.mxu0 0
        %654 = vmatpush1.bf16.msra.mxu0 0
        %655 = vmatprep.subr.bf16.mxu0 0
        %656 = vmatpush1.bf16.msra.mxu0 0
        %657 = vmatprep.subr.bf16.mxu0 0
        %658 = vmatpush1.bf16.msra.mxu0 0
        %659 = vmatprep.subr.bf16.mxu0 0
        %660 = vmatpush1.bf16.msra.mxu0 0
        %661 = vmatprep.subr.bf16.mxu0 0
        %662 = vmatpush1.bf16.msra.mxu0 0
        %663 = vmatprep.subr.bf16.mxu0 %v647
        %664 = vmatpush1.bf16.msra.mxu0 %v644
        %665 = vmatprep.subr.bf16.mxu0 0
        %666 = vmatpush2.bf16.msra.mxu0 0
        %667 = vmatprep.subr.bf16.mxu0 0
        %668 = vmatpush2.bf16.msra.mxu0 0
        %669 = vmatprep.subr.bf16.mxu0 0
        %670 = vmatpush2.bf16.msra.mxu0 0
        %671 = vmatprep.subr.bf16.mxu0 0
        %672 = vmatpush2.bf16.msra.mxu0 0
        %673 = vmatprep.subr.bf16.mxu0 0
        %674 = vmatpush2.bf16.msra.mxu0 0
        %675 = vmatprep.subr.bf16.mxu0 0
        %676 = vmatpush2.bf16.msra.mxu0 0
        %677 = vmatprep.subr.bf16.mxu0 0
        %678 = vmatpush2.bf16.msra.mxu0 0
        %679 = vmatprep.subr.bf16.mxu0 0
        %680 = vmatpush2.bf16.msra.mxu0 0
        %681 = vmatprep.mubr.bf16.mxu0 0
        %682 = vmatmul.mubr.bf16.gmra.mxu0 %v641
        %v683 = vpop.f32.mrf.mxu0
        %v684 = vadd.f32 0.0, %v683
        %v685 = vpop.f32.mrf.mxu0
        %v686 = vadd.f32 0.0, %v685
        %v687 = vpop.f32.mrf.mxu0
        %v688 = vpop.f32.mrf.mxu0
        %689 = vdwg.mxu0
        %v690 = vadd.f32 %v627, %v684
        %v691 = vadd.f32 %v628, %v686
        %692 = vst [vmem:[#allocation4] sm:$0xff] %v690
        %693 = vst [vmem:[#allocation4 + $0x8] sm:$0xff] %v691
        %v694 = vld [vmem:[#allocation4] sm:$0xff]
        %v695 = vld [vmem:[#allocation4 + $0x8] sm:$0xff]
        %s696 = scalar_lea.vmem [#allocation2], 16
        %v697 = vld [vmem:[%s696] sm:$0xf]
        %698 = vrot.lane.b32.xlu0 %v427, 111
        %v699 = vpop.permute.xlu0 %698
        %700 = vrot.lane.b32.xlu0 %v428, 111
        %v701 = vpop.permute.xlu0 %700
        %702 = vrot.lane.b32.xlu0 %v496, 111
        %v703 = vpop.permute.xlu0 %702
        %vm704 = vcmask 908288
        %v705 = vsel %vm704, %v699, %v701
        %v706 = vsel %vm704, %v701, %v703
        %v708 = vsel %vm429, %v697, 0
        %v711 = vsel %vm433, %v705, 0
        %v714 = vsel %vm433, %v706, 0
        %716 = vmatprep.subr.bf16.mxu0 0
        %717 = vmatpush1.bf16.msra.mxu0 0
        %718 = vmatprep.subr.bf16.mxu0 0
        %719 = vmatpush1.bf16.msra.mxu0 0
        %720 = vmatprep.subr.bf16.mxu0 0
        %721 = vmatpush1.bf16.msra.mxu0 0
        %722 = vmatprep.subr.bf16.mxu0 0
        %723 = vmatpush1.bf16.msra.mxu0 0
        %724 = vmatprep.subr.bf16.mxu0 0
        %725 = vmatpush1.bf16.msra.mxu0 0
        %726 = vmatprep.subr.bf16.mxu0 0
        %727 = vmatpush1.bf16.msra.mxu0 0
        %728 = vmatprep.subr.bf16.mxu0 0
        %729 = vmatpush1.bf16.msra.mxu0 0
        %730 = vmatprep.subr.bf16.mxu0 %v714
        %731 = vmatpush1.bf16.msra.mxu0 %v711
        %732 = vmatprep.subr.bf16.mxu0 0
        %733 = vmatpush2.bf16.msra.mxu0 0
        %734 = vmatprep.subr.bf16.mxu0 0
        %735 = vmatpush2.bf16.msra.mxu0 0
        %736 = vmatprep.subr.bf16.mxu0 0
        %737 = vmatpush2.bf16.msra.mxu0 0
        %738 = vmatprep.subr.bf16.mxu0 0
        %739 = vmatpush2.bf16.msra.mxu0 0
        %740 = vmatprep.subr.bf16.mxu0 0
        %741 = vmatpush2.bf16.msra.mxu0 0
        %742 = vmatprep.subr.bf16.mxu0 0
        %743 = vmatpush2.bf16.msra.mxu0 0
        %744 = vmatprep.subr.bf16.mxu0 0
        %745 = vmatpush2.bf16.msra.mxu0 0
        %746 = vmatprep.subr.bf16.mxu0 0
        %747 = vmatpush2.bf16.msra.mxu0 0
        %748 = vmatprep.mubr.bf16.mxu0 0
        %749 = vmatmul.mubr.bf16.gmra.mxu0 %v708
        %v750 = vpop.f32.mrf.mxu0
        %v751 = vadd.f32 0.0, %v750
        %v752 = vpop.f32.mrf.mxu0
        %v753 = vadd.f32 0.0, %v752
        %v754 = vpop.f32.mrf.mxu0
        %v755 = vpop.f32.mrf.mxu0
        %756 = vdwg.mxu0
        %v757 = vadd.f32 %v694, %v751
        %v758 = vadd.f32 %v695, %v753
        %759 = vst [vmem:[#allocation4] sm:$0xff] %v757
        %760 = vst [vmem:[#allocation4 + $0x8] sm:$0xff] %v758
        %v761 = vld [vmem:[#allocation4] sm:$0xff]
        %v762 = vld [vmem:[#allocation4 + $0x8] sm:$0xff]
        %s763 = scalar_lea.vmem [#allocation2], 20
        %v764 = vld [vmem:[%s763] sm:$0xf]
        %765 = vrot.lane.b32.xlu0 %v427, 110
        %v766 = vpop.permute.xlu0 %765
        %767 = vrot.lane.b32.xlu0 %v428, 110
        %v768 = vpop.permute.xlu0 %767
        %769 = vrot.lane.b32.xlu0 %v496, 110
        %v770 = vpop.permute.xlu0 %769
        %vm771 = vcmask 900096
        %v772 = vsel %vm771, %v766, %v768
        %v773 = vsel %vm771, %v768, %v770
        %v775 = vsel %vm429, %v764, 0
        %v778 = vsel %vm433, %v772, 0
        %v781 = vsel %vm433, %v773, 0
        %783 = vmatprep.subr.bf16.mxu0 0
        %784 = vmatpush1.bf16.msra.mxu0 0
        %785 = vmatprep.subr.bf16.mxu0 0
        %786 = vmatpush1.bf16.msra.mxu0 0
        %787 = vmatprep.subr.bf16.mxu0 0
        %788 = vmatpush1.bf16.msra.mxu0 0
        %789 = vmatprep.subr.bf16.mxu0 0
        %790 = vmatpush1.bf16.msra.mxu0 0
        %791 = vmatprep.subr.bf16.mxu0 0
        %792 = vmatpush1.bf16.msra.mxu0 0
        %793 = vmatprep.subr.bf16.mxu0 0
        %794 = vmatpush1.bf16.msra.mxu0 0
        %795 = vmatprep.subr.bf16.mxu0 0
        %796 = vmatpush1.bf16.msra.mxu0 0
        %797 = vmatprep.subr.bf16.mxu0 %v781
        %798 = vmatpush1.bf16.msra.mxu0 %v778
        %799 = vmatprep.subr.bf16.mxu0 0
        %800 = vmatpush2.bf16.msra.mxu0 0
        %801 = vmatprep.subr.bf16.mxu0 0
        %802 = vmatpush2.bf16.msra.mxu0 0
        %803 = vmatprep.subr.bf16.mxu0 0
        %804 = vmatpush2.bf16.msra.mxu0 0
        %805 = vmatprep.subr.bf16.mxu0 0
        %806 = vmatpush2.bf16.msra.mxu0 0
        %807 = vmatprep.subr.bf16.mxu0 0
        %808 = vmatpush2.bf16.msra.mxu0 0
        %809 = vmatprep.subr.bf16.mxu0 0
        %810 = vmatpush2.bf16.msra.mxu0 0
        %811 = vmatprep.subr.bf16.mxu0 0
        %812 = vmatpush2.bf16.msra.mxu0 0
        %813 = vmatprep.subr.bf16.mxu0 0
        %814 = vmatpush2.bf16.msra.mxu0 0
        %815 = vmatprep.mubr.bf16.mxu0 0
        %816 = vmatmul.mubr.bf16.gmra.mxu0 %v775
        %v817 = vpop.f32.mrf.mxu0
        %v818 = vadd.f32 0.0, %v817
        %v819 = vpop.f32.mrf.mxu0
        %v820 = vadd.f32 0.0, %v819
        %v821 = vpop.f32.mrf.mxu0
        %v822 = vpop.f32.mrf.mxu0
        %823 = vdwg.mxu0
        %v824 = vadd.f32 %v761, %v818
        %v825 = vadd.f32 %v762, %v820
        %826 = vst [vmem:[#allocation4] sm:$0xff] %v824
        %827 = vst [vmem:[#allocation4 + $0x8] sm:$0xff] %v825
        %v828 = vld [vmem:[#allocation4] sm:$0xff]
        %v829 = vld [vmem:[#allocation4 + $0x8] sm:$0xff]
        %s830 = scalar_lea.vmem [#allocation2], 24
        %v831 = vld [vmem:[%s830] sm:$0xf]
        %832 = vrot.lane.b32.xlu0 %v427, 96
        %v833 = vpop.permute.xlu0 %832
        %834 = vrot.lane.b32.xlu0 %v428, 96
        %v835 = vpop.permute.xlu0 %834
        %836 = vrot.lane.b32.xlu0 %v496, 96
        %v837 = vpop.permute.xlu0 %836
        %vm838 = vcmask 785408
        %v839 = vsel %vm838, %v833, %v835
        %v840 = vsel %vm838, %v835, %v837
        %v842 = vsel %vm429, %v831, 0
        %v845 = vsel %vm433, %v839, 0
        %v848 = vsel %vm433, %v840, 0
        %850 = vmatprep.subr.bf16.mxu0 0
        %851 = vmatpush1.bf16.msra.mxu0 0
        %852 = vmatprep.subr.bf16.mxu0 0
        %853 = vmatpush1.bf16.msra.mxu0 0
        %854 = vmatprep.subr.bf16.mxu0 0
        %855 = vmatpush1.bf16.msra.mxu0 0
        %856 = vmatprep.subr.bf16.mxu0 0
        %857 = vmatpush1.bf16.msra.mxu0 0
        %858 = vmatprep.subr.bf16.mxu0 0
        %859 = vmatpush1.bf16.msra.mxu0 0
        %860 = vmatprep.subr.bf16.mxu0 0
        %861 = vmatpush1.bf16.msra.mxu0 0
        %862 = vmatprep.subr.bf16.mxu0 0
        %863 = vmatpush1.bf16.msra.mxu0 0
        %864 = vmatprep.subr.bf16.mxu0 %v848
        %865 = vmatpush1.bf16.msra.mxu0 %v845
        %866 = vmatprep.subr.bf16.mxu0 0
        %867 = vmatpush2.bf16.msra.mxu0 0
        %868 = vmatprep.subr.bf16.mxu0 0
        %869 = vmatpush2.bf16.msra.mxu0 0
        %870 = vmatprep.subr.bf16.mxu0 0
        %871 = vmatpush2.bf16.msra.mxu0 0
        %872 = vmatprep.subr.bf16.mxu0 0
        %873 = vmatpush2.bf16.msra.mxu0 0
        %874 = vmatprep.subr.bf16.mxu0 0
        %875 = vmatpush2.bf16.msra.mxu0 0
        %876 = vmatprep.subr.bf16.mxu0 0
        %877 = vmatpush2.bf16.msra.mxu0 0
        %878 = vmatprep.subr.bf16.mxu0 0
        %879 = vmatpush2.bf16.msra.mxu0 0
        %880 = vmatprep.subr.bf16.mxu0 0
        %881 = vmatpush2.bf16.msra.mxu0 0
        %882 = vmatprep.mubr.bf16.mxu0 0
        %883 = vmatmul.mubr.bf16.gmra.mxu0 %v842
        %v884 = vpop.f32.mrf.mxu0
        %v885 = vadd.f32 0.0, %v884
        %v886 = vpop.f32.mrf.mxu0
        %v887 = vadd.f32 0.0, %v886
        %v888 = vpop.f32.mrf.mxu0
        %v889 = vpop.f32.mrf.mxu0
        %890 = vdwg.mxu0
        %v891 = vadd.f32 %v828, %v885
        %v892 = vadd.f32 %v829, %v887
        %893 = vst [vmem:[#allocation4] sm:$0xff] %v891
        %894 = vst [vmem:[#allocation4 + $0x8] sm:$0xff] %v892
        %v895 = vld [vmem:[#allocation4] sm:$0xff]
        %v896 = vld [vmem:[#allocation4 + $0x8] sm:$0xff]
        %s897 = scalar_lea.vmem [#allocation2], 28
        %v898 = vld [vmem:[%s897] sm:$0xf]
        %899 = vrot.lane.b32.xlu0 %v427, 95
        %v900 = vpop.permute.xlu0 %899
        %901 = vrot.lane.b32.xlu0 %v428, 95
        %v902 = vpop.permute.xlu0 %901
        %903 = vrot.lane.b32.xlu0 %v496, 95
        %v904 = vpop.permute.xlu0 %903
        %vm905 = vcmask 777216
        %v906 = vsel %vm905, %v900, %v902
        %v907 = vsel %vm905, %v902, %v904
        %v909 = vsel %vm429, %v898, 0
        %v912 = vsel %vm433, %v906, 0
        %v915 = vsel %vm433, %v907, 0
        %917 = vmatprep.subr.bf16.mxu0 0
        %918 = vmatpush1.bf16.msra.mxu0 0
        %919 = vmatprep.subr.bf16.mxu0 0
        %920 = vmatpush1.bf16.msra.mxu0 0
        %921 = vmatprep.subr.bf16.mxu0 0
        %922 = vmatpush1.bf16.msra.mxu0 0
        %923 = vmatprep.subr.bf16.mxu0 0
        %924 = vmatpush1.bf16.msra.mxu0 0
        %925 = vmatprep.subr.bf16.mxu0 0
        %926 = vmatpush1.bf16.msra.mxu0 0
        %927 = vmatprep.subr.bf16.mxu0 0
        %928 = vmatpush1.bf16.msra.mxu0 0
        %929 = vmatprep.subr.bf16.mxu0 0
        %930 = vmatpush1.bf16.msra.mxu0 0
        %931 = vmatprep.subr.bf16.mxu0 %v915
        %932 = vmatpush1.bf16.msra.mxu0 %v912
        %933 = vmatprep.subr.bf16.mxu0 0
        %934 = vmatpush2.bf16.msra.mxu0 0
        %935 = vmatprep.subr.bf16.mxu0 0
        %936 = vmatpush2.bf16.msra.mxu0 0
        %937 = vmatprep.subr.bf16.mxu0 0
        %938 = vmatpush2.bf16.msra.mxu0 0
        %939 = vmatprep.subr.bf16.mxu0 0
        %940 = vmatpush2.bf16.msra.mxu0 0
        %941 = vmatprep.subr.bf16.mxu0 0
        %942 = vmatpush2.bf16.msra.mxu0 0
        %943 = vmatprep.subr.bf16.mxu0 0
        %944 = vmatpush2.bf16.msra.mxu0 0
        %945 = vmatprep.subr.bf16.mxu0 0
        %946 = vmatpush2.bf16.msra.mxu0 0
        %947 = vmatprep.subr.bf16.mxu0 0
        %948 = vmatpush2.bf16.msra.mxu0 0
        %949 = vmatprep.mubr.bf16.mxu0 0
        %950 = vmatmul.mubr.bf16.gmra.mxu0 %v909
        %v951 = vpop.f32.mrf.mxu0
        %v952 = vadd.f32 0.0, %v951
        %v953 = vpop.f32.mrf.mxu0
        %v954 = vadd.f32 0.0, %v953
        %v955 = vpop.f32.mrf.mxu0
        %v956 = vpop.f32.mrf.mxu0
        %957 = vdwg.mxu0
        %v958 = vadd.f32 %v895, %v952
        %v959 = vadd.f32 %v896, %v954
        %960 = vst [vmem:[#allocation4] sm:$0xff] %v958
        %961 = vst [vmem:[#allocation4 + $0x8] sm:$0xff] %v959
        %v962 = vld [vmem:[#allocation4] sm:$0xff]
        %v963 = vld [vmem:[#allocation4 + $0x8] sm:$0xff]
        %s964 = scalar_lea.vmem [#allocation2], 32
        %v965 = vld [vmem:[%s964] sm:$0xf]
        %966 = vrot.lane.b32.xlu0 %v427, 94
        %v967 = vpop.permute.xlu0 %966
        %968 = vrot.lane.b32.xlu0 %v428, 94
        %v969 = vpop.permute.xlu0 %968
        %970 = vrot.lane.b32.xlu0 %v496, 94
        %v971 = vpop.permute.xlu0 %970
        %vm972 = vcmask 769024
        %v973 = vsel %vm972, %v967, %v969
        %v974 = vsel %vm972, %v969, %v971
        %v976 = vsel %vm429, %v965, 0
        %v979 = vsel %vm433, %v973, 0
        %v982 = vsel %vm433, %v974, 0
        %984 = vmatprep.subr.bf16.mxu0 0
        %985 = vmatpush1.bf16.msra.mxu0 0
        %986 = vmatprep.subr.bf16.mxu0 0
        %987 = vmatpush1.bf16.msra.mxu0 0
        %988 = vmatprep.subr.bf16.mxu0 0
        %989 = vmatpush1.bf16.msra.mxu0 0
        %990 = vmatprep.subr.bf16.mxu0 0
        %991 = vmatpush1.bf16.msra.mxu0 0
        %992 = vmatprep.subr.bf16.mxu0 0
        %993 = vmatpush1.bf16.msra.mxu0 0
        %994 = vmatprep.subr.bf16.mxu0 0
        %995 = vmatpush1.bf16.msra.mxu0 0
        %996 = vmatprep.subr.bf16.mxu0 0
        %997 = vmatpush1.bf16.msra.mxu0 0
        %998 = vmatprep.subr.bf16.mxu0 %v982
        %999 = vmatpush1.bf16.msra.mxu0 %v979
        %1000 = vmatprep.subr.bf16.mxu0 0
        %1001 = vmatpush2.bf16.msra.mxu0 0
        %1002 = vmatprep.subr.bf16.mxu0 0
        %1003 = vmatpush2.bf16.msra.mxu0 0
        %1004 = vmatprep.subr.bf16.mxu0 0
        %1005 = vmatpush2.bf16.msra.mxu0 0
        %1006 = vmatprep.subr.bf16.mxu0 0
        %1007 = vmatpush2.bf16.msra.mxu0 0
        %1008 = vmatprep.subr.bf16.mxu0 0
        %1009 = vmatpush2.bf16.msra.mxu0 0
        %1010 = vmatprep.subr.bf16.mxu0 0
        %1011 = vmatpush2.bf16.msra.mxu0 0
        %1012 = vmatprep.subr.bf16.mxu0 0
        %1013 = vmatpush2.bf16.msra.mxu0 0
        %1014 = vmatprep.subr.bf16.mxu0 0
        %1015 = vmatpush2.bf16.msra.mxu0 0
        %1016 = vmatprep.mubr.bf16.mxu0 0
        %1017 = vmatmul.mubr.bf16.gmra.mxu0 %v976
        %v1018 = vpop.f32.mrf.mxu0
        %v1019 = vadd.f32 0.0, %v1018
        %v1020 = vpop.f32.mrf.mxu0
        %v1021 = vadd.f32 0.0, %v1020
        %v1022 = vpop.f32.mrf.mxu0
        %v1023 = vpop.f32.mrf.mxu0
        %1024 = vdwg.mxu0
        %v1025 = vadd.f32 %v962, %v1019
        %v1026 = vadd.f32 %v963, %v1021
        %1027 = vst [vmem:[#allocation4] sm:$0xff] %v1025
        %1028 = vst [vmem:[#allocation4 + $0x8] sm:$0xff] %v1026
        %v1029 = vld [vmem:[#allocation4] sm:$0xff]
        %v1030 = vld [vmem:[#allocation4 + $0x8] sm:$0xff]
        %v1031 = vld [vmem:[#allocation3] sm:$0xff]
        %1033 = vset.pattern.permute.xlu0 0
        %1034 = vperm.xlu0 %1033, %v1031
        %v1035 = vpop.permute.xlu0 %1034
        %v1037 = vadd.f32 %v1029, %v1035
        %v1038 = vadd.f32 %v1030, %v1035
        %1039 = vst [vmem:[%s313] sm:$0xff] %v1037
        %1040 = vst [vmem:[%s313 + $0x8] sm:$0xff] %v1038
        %s1041 = sand.u32 %s205, 1
        %s1042 = scalar_lea.sflag [#allocation6], %s1041
        %s1043 = sand.u32 %s205, 1
        %s1044 = smul.addr %s1043, 16
        %s1045 = scalar_lea.vmem [#allocation5], %s1044
        // Predicated region
        $region53: #{tpu_custom_call.1} parent=47 // pred_check
          %p1046 = pneg %p215
        $region54: #{tpu_custom_call.1} parent=47 // pred_check_branch
          %1048 = sbr.rel (%p1046) target = $region56
        $region55: #{tpu_custom_call.1} parent=47 // pred_region
          %s1049 = smul.u32 2, %s26
          %s1051 = ssub.s32 256, 256
          %1052 = vsyncadd %s1042, %s1051
          %s1053 = smul.addr %s25, 2
          %s1054 = sadd.s32 %s1049, %s1053
          %s1055 = smul.addr %s1054, 128
          %s1056 = scalar_lea.hbm %s7, %s1055
          %s1058 = sshll.u32 %s1045, 4
          %s1059 = int_to_ptr.vmem [resolvable:$true] %s1058
          %1061 = dma.vmem_to_hbm [thread:$0]  %s1059, 256, %s1056, %s1042
        $region56: #{tpu_custom_call.1} parent=47 // pred_fallthru
          _
      $region48: #{tpu_custom_call.1} parent=5 // pred_fallthru
        _
      %p1062 = scmp.le.s32.totalorder 2, %s16
      // Predicated region
      $region57: #{tpu_custom_call.1} parent=5 // pred_check
        %p1063 = pneg %p1062
      $region58: #{tpu_custom_call.1} parent=5 // pred_check_branch
        %1065 = sbr.rel (%p1063) target = $region60
      $region59: #{tpu_custom_call.1} parent=5 // pred_region
        %s1066 = ssub.s32 %s16, 2
        // Predicated region
        $region61: #{tpu_custom_call.1} parent=59 // pred_check
          %p1067 = pneg %p221
        $region62: #{tpu_custom_call.1} parent=59 // pred_check_branch
          %1069 = sbr.rel (%p1067) target = $region64
        $region63: #{tpu_custom_call.1} parent=59 // pred_region
          %s1070 = sand.u32 %s206, 1
          %s1071 = scalar_lea.sflag [#allocation6], %s1070
          %s1072 = sand.u32 %s206, 1
          %s1073 = smul.addr %s1072, 16
          %s1074 = scalar_lea.vmem [#allocation5], %s1073
          %1075 = dma.done %s1071, 256
        $region64: #{tpu_custom_call.1} parent=59 // pred_fallthru
          _
      $region60: #{tpu_custom_call.1} parent=5 // pred_fallthru
        _
    $region6: #{tpu_custom_call.1} parent=1 // loop_footer
      %s20 = sadd.s32 1, %s16
    $region7: #{tpu_custom_call.1} parent=1 // loop_footer_branch
      %15 = sbr.rel target = $region3
    $region8: #{tpu_custom_call.1} parent=1 // loop_exit
      _
    %1076 = vsyncpa [#allocation6], 1
    %s1077 = scalar_lea.sflag [#allocation6], 1
    %1078 = vsyncpa %s1077, 1

</llo_original>
